<compile_context>
chip_gen: v6e
topology: v6e:2x2x1
jax: 0.10.0
libtpu: 0.0.40
codegen_flags: <defaults>
</compile_context>

<pallas_src>
import jax
import jax.numpy as jnp
from jax.experimental import pallas as pl
from jax.experimental.pallas import tpu as pltpu

INPUT_BITS = 256
H1 = 512
H2 = 256
OUT = 1
NEG_SLOPE = 0.2


def _leaky_relu(x, slope=NEG_SLOPE):
    return jnp.where(x > 0, x, slope * x)


def discriminator_kernel(x_ref, w1_ref, b1_ref, w2_ref, b2_ref, w3_ref, b3_ref,
                         o_ref):
    # x tile: (TB, 256) bf16; weights bf16, resident in VMEM across the grid.
    x = x_ref[...]

    # Layer 1 (MXU): bf16 x bf16 -> f32 accumulate.
    h1 = jnp.dot(x, w1_ref[...], preferred_element_type=jnp.float32)   # (TB, 512)
    h1 = _leaky_relu(h1 + b1_ref[...])

    # Layer 2 (MXU).
    h2 = jnp.dot(h1.astype(jnp.bfloat16), w2_ref[...],
                 preferred_element_type=jnp.float32)                   # (TB, 256)
    h2 = _leaky_relu(h2 + b2_ref[...])

    # Layer 3 (256 -> 1): keep off the MXU.  VPU multiply + XLU cross-lane
    # reduce; b3 is a scalar read from SMEM.
    w3 = w3_ref[...].astype(jnp.float32)                               # (1, 256)
    out = jnp.sum(h2 * w3, axis=-1, keepdims=True) + b3_ref[0, 0]      # (TB, 1)
    o_ref[...] = out.astype(o_ref.dtype)


def discriminator_forward(x, params, *, block_b=256):
    """x: (B, 256) float.  params: (w1,b1,w2,b2,w3,b3) from init_params."""
    w1, b1, w2, b2, w3, b3 = params
    batch = x.shape[0]

    # Batch tile: aim for >=256 rows (fills the MXU M-dim on v6e/v7x), but
    # clamp for tiny batches; always a multiple of 8 (sublane height).
    tb = min(block_b, max(8, ((batch + 7) // 8) * 8))
    pad_b = ((batch + tb - 1) // tb) * tb

    xb = x.astype(jnp.bfloat16)
    if pad_b != batch:
        xb = jnp.pad(xb, ((0, pad_b - batch), (0, 0)))

    grid = (pad_b // tb,)

    flops = 2 * pad_b * (INPUT_BITS * H1 + H1 * H2 + H2 * OUT)
    bytes_accessed = (pad_b * INPUT_BITS * 2                      # x (bf16)
                      + (INPUT_BITS * H1 + H1 * H2 + H2) * 2      # weights (bf16)
                      + (H1 + H2 + 1) * 4                         # biases (f32)
                      + pad_b * OUT * 4)                          # output (f32)

    out = pl.pallas_call(
        discriminator_kernel,
        out_shape=jax.ShapeDtypeStruct((pad_b, OUT), jnp.float32),
        grid=grid,
        in_specs=[
            pl.BlockSpec((tb, INPUT_BITS), lambda i: (i, 0)),       # x tile
            pl.BlockSpec((INPUT_BITS, H1), lambda i: (0, 0)),       # w1 (resident)
            pl.BlockSpec((1, H1), lambda i: (0, 0)),                # b1
            pl.BlockSpec((H1, H2), lambda i: (0, 0)),               # w2 (resident)
            pl.BlockSpec((1, H2), lambda i: (0, 0)),                # b2
            pl.BlockSpec((1, H2), lambda i: (0, 0)),                # w3 row
            pl.BlockSpec(memory_space=pltpu.MemorySpace.SMEM),      # b3 scalar
        ],
        out_specs=pl.BlockSpec((tb, OUT), lambda i: (i, 0)),
        compiler_params=pltpu.CompilerParams(
            dimension_semantics=("parallel",)),
        cost_estimate=pl.CostEstimate(
            flops=flops, transcendentals=0,
            bytes_accessed=int(bytes_accessed)),
    )(xb, w1, b1, w2, b2, w3, b3)

    return out[:batch]


def init_params(key):
    # PyTorch nn.Linear-style init (uniform +/- 1/sqrt(fan_in)).
    # Weights stored (in, out) and cast to bf16; biases kept f32.
    ks = jax.random.split(key, 6)

    def lin(kw, kb, fan_in, fan_out):
        bound = 1.0 / jnp.sqrt(fan_in)
        w = jax.random.uniform(kw, (fan_in, fan_out), jnp.float32, -bound, bound)
        b = jax.random.uniform(kb, (1, fan_out), jnp.float32, -bound, bound)
        return w, b

    w1, b1 = lin(ks[0], ks[1], INPUT_BITS, H1)
    w2, b2 = lin(ks[2], ks[3], H1, H2)
    w3, b3 = lin(ks[4], ks[5], H2, OUT)
    return (w1.astype(jnp.bfloat16), b1,
            w2.astype(jnp.bfloat16), b2,
            w3.T.astype(jnp.bfloat16),   # (1, 256) row for the 1-wide layer
            b3)                          # (1, 1) scalar, f32


def reference_forward(x, params):
    # Pure-JAX reference with the same bf16-operand / f32-accumulate math.
    w1, b1, w2, b2, w3, b3 = params
    xb = x.astype(jnp.bfloat16)
    h1 = _leaky_relu(jnp.dot(xb, w1, preferred_element_type=jnp.float32) + b1)
    h2 = _leaky_relu(jnp.dot(h1.astype(jnp.bfloat16), w2,
                             preferred_element_type=jnp.float32) + b2)
    return jnp.sum(h2 * w3.astype(jnp.float32), axis=-1, keepdims=True) + b3[0, 0]


if __name__ == "__main__":
    key = jax.random.PRNGKey(0)
    k_x, k_p = jax.random.split(key)

    # 384 rows: two 256-row tiles after padding -> exercises the batch grid,
    # the padding path, and the resident-weight BlockSpecs.
    batch = 384
    x = (jax.random.uniform(k_x, (batch, INPUT_BITS)) > 0.5).astype(jnp.float32)
    params = init_params(k_p)

    out = jax.block_until_ready(discriminator_forward(x, params))

    ref = reference_forward(x, params)
    assert out.shape == (batch, OUT)
    assert jnp.allclose(out, ref, atol=5e-3, rtol=5e-3), float(
        jnp.max(jnp.abs(out - ref)))

    print("KERNEL_OK")
</pallas_src>

<mosaic_0001>
module attributes {stable_mosaic.version = 11 : i64} {
  func.func @discriminator_kernel(%arg0: i32, %arg1: memref<256x256xbf16, #tpu.memory_space<vmem>>, %arg2: memref<256x512xbf16, #tpu.memory_space<vmem>>, %arg3: memref<1x512xf32, #tpu.memory_space<vmem>>, %arg4: memref<512x256xbf16, #tpu.memory_space<vmem>>, %arg5: memref<1x256xf32, #tpu.memory_space<vmem>>, %arg6: memref<1x256xbf16, #tpu.memory_space<vmem>>, %arg7: memref<1x1xf32, #tpu.memory_space<smem>>, %arg8: memref<256x1xf32, #tpu.memory_space<vmem>>) attributes {dimension_semantics = [#tpu.dimension_semantics<parallel>], iteration_bounds = array<i64: 2>, scalar_prefetch = 0 : i64, scratch_operands = 0 : i64, tpu.core_type = #tpu.core_type<tc>, window_params = [{transform_indices = @transform_0, window_bounds = array<i64: 256, 256>}, {pipeline_mode = #tpu.pipeline_mode<synchronous>, transform_indices = @transform_1, window_bounds = array<i64: 256, 512>}, {pipeline_mode = #tpu.pipeline_mode<synchronous>, transform_indices = @transform_2, window_bounds = array<i64: 1, 512>}, {pipeline_mode = #tpu.pipeline_mode<synchronous>, transform_indices = @transform_3, window_bounds = array<i64: 512, 256>}, {pipeline_mode = #tpu.pipeline_mode<synchronous>, transform_indices = @transform_4, window_bounds = array<i64: 1, 256>}, {pipeline_mode = #tpu.pipeline_mode<synchronous>, transform_indices = @transform_5, window_bounds = array<i64: 1, 256>}, {transform_indices = @transform_6, window_bounds = array<i64: 1, 1>}, {transform_indices = @transform_7, window_bounds = array<i64: 256, 1>}]} {
    %c0 = arith.constant 0 : index
    %c0_0 = arith.constant 0 : index
    %0 = vector.load %arg1[%c0, %c0_0] : memref<256x256xbf16, #tpu.memory_space<vmem>>, vector<256x256xbf16>
    %c0_1 = arith.constant 0 : index
    %c0_2 = arith.constant 0 : index
    %1 = vector.load %arg2[%c0_1, %c0_2] : memref<256x512xbf16, #tpu.memory_space<vmem>>, vector<256x512xbf16>
    %cst = arith.constant dense<0.000000e+00> : vector<256x512xf32>
    %2 = tpu.matmul %0, %1, %cst {dimension_numbers = #tpu.dot_dimension_numbers<[1], [0], [0], [1], [0, 0, 1, 1], [], []>} : vector<256x256xbf16>, vector<256x512xbf16>, vector<256x512xf32> -> vector<256x512xf32>
    %c0_3 = arith.constant 0 : index
    %c0_4 = arith.constant 0 : index
    %3 = vector.load %arg3[%c0_3, %c0_4] : memref<1x512xf32, #tpu.memory_space<vmem>>, vector<1x512xf32>
    %4 = vector.broadcast %3 : vector<1x512xf32> to vector<256x512xf32>
    %5 = arith.addf %2, %4 : vector<256x512xf32>
    %cst_5 = arith.constant 0.000000e+00 : f32
    %6 = vector.broadcast %cst_5 : f32 to vector<256x512xf32>
    %7 = arith.cmpf ogt, %5, %6 : vector<256x512xf32>
    %cst_6 = arith.constant 2.000000e-01 : f32
    %8 = vector.broadcast %cst_6 : f32 to vector<256x512xf32>
    %9 = arith.mulf %8, %5 : vector<256x512xf32>
    %10 = arith.select %7, %5, %9 : vector<256x512xi1>, vector<256x512xf32>
    %11 = arith.truncf %10 : vector<256x512xf32> to vector<256x512xbf16>
    %c0_7 = arith.constant 0 : index
    %c0_8 = arith.constant 0 : index
    %12 = vector.load %arg4[%c0_7, %c0_8] : memref<512x256xbf16, #tpu.memory_space<vmem>>, vector<512x256xbf16>
    %cst_9 = arith.constant dense<0.000000e+00> : vector<256x256xf32>
    %13 = tpu.matmul %11, %12, %cst_9 {dimension_numbers = #tpu.dot_dimension_numbers<[1], [0], [0], [1], [0, 0, 1, 1], [], []>} : vector<256x512xbf16>, vector<512x256xbf16>, vector<256x256xf32> -> vector<256x256xf32>
    %c0_10 = arith.constant 0 : index
    %c0_11 = arith.constant 0 : index
    %14 = vector.load %arg5[%c0_10, %c0_11] : memref<1x256xf32, #tpu.memory_space<vmem>>, vector<1x256xf32>
    %15 = vector.broadcast %14 : vector<1x256xf32> to vector<256x256xf32>
    %16 = arith.addf %13, %15 : vector<256x256xf32>
    %cst_12 = arith.constant 0.000000e+00 : f32
    %17 = vector.broadcast %cst_12 : f32 to vector<256x256xf32>
    %18 = arith.cmpf ogt, %16, %17 : vector<256x256xf32>
    %cst_13 = arith.constant 2.000000e-01 : f32
    %19 = vector.broadcast %cst_13 : f32 to vector<256x256xf32>
    %20 = arith.mulf %19, %16 : vector<256x256xf32>
    %21 = arith.select %18, %16, %20 : vector<256x256xi1>, vector<256x256xf32>
    %c0_14 = arith.constant 0 : index
    %c0_15 = arith.constant 0 : index
    %22 = vector.load %arg6[%c0_14, %c0_15] : memref<1x256xbf16, #tpu.memory_space<vmem>>, vector<1x256xbf16>
    %23 = arith.extf %22 : vector<1x256xbf16> to vector<1x256xf32>
    %24 = vector.broadcast %23 : vector<1x256xf32> to vector<256x256xf32>
    %25 = arith.mulf %21, %24 : vector<256x256xf32>
    %cst_16 = arith.constant dense<0.000000e+00> : vector<256xf32>
    %26 = vector.multi_reduction <add>, %25, %cst_16 [1] : vector<256x256xf32> to vector<256xf32>
    %27 = vector.shape_cast %26 : vector<256xf32> to vector<256x1xf32>
    %c0_17 = arith.constant 0 : index
    %c0_18 = arith.constant 0 : index
    %28 = memref.load %arg7[%c0_17, %c0_18] : memref<1x1xf32, #tpu.memory_space<smem>>
    %29 = vector.broadcast %28 : f32 to vector<256x1xf32>
    %30 = arith.addf %27, %29 : vector<256x1xf32>
    %c0_19 = arith.constant 0 : index
    %c0_20 = arith.constant 0 : index
    %31 = vector.load %arg8[%c0_19, %c0_20] : memref<256x1xf32, #tpu.memory_space<vmem>>, vector<256x1xf32>
    tpu.vector_store %arg8[%c0_19, %c0_20], %30 {strides = array<i32>} : memref<256x1xf32, #tpu.memory_space<vmem>>, vector<256x1xf32>,
    return
  }
  func.func @transform_0(%arg0: i32) -> (i32, i32) {
    %c0_i32 = arith.constant 0 : i32
    %c0_i32_0 = arith.constant 0 : i32
    return %arg0, %c0_i32 : i32, i32
  }
  func.func @transform_1(%arg0: i32) -> (i32, i32) {
    %c0_i32 = arith.constant 0 : i32
    %c0_i32_0 = arith.constant 0 : i32
    %c0_i32_1 = arith.constant 0 : i32
    return %c0_i32, %c0_i32_0 : i32, i32
  }
  func.func @transform_2(%arg0: i32) -> (i32, i32) {
    %c0_i32 = arith.constant 0 : i32
    %c0_i32_0 = arith.constant 0 : i32
    %c0_i32_1 = arith.constant 0 : i32
    return %c0_i32, %c0_i32_0 : i32, i32
  }
  func.func @transform_3(%arg0: i32) -> (i32, i32) {
    %c0_i32 = arith.constant 0 : i32
    %c0_i32_0 = arith.constant 0 : i32
    %c0_i32_1 = arith.constant 0 : i32
    return %c0_i32, %c0_i32_0 : i32, i32
  }
  func.func @transform_4(%arg0: i32) -> (i32, i32) {
    %c0_i32 = arith.constant 0 : i32
    %c0_i32_0 = arith.constant 0 : i32
    %c0_i32_1 = arith.constant 0 : i32
    return %c0_i32, %c0_i32_0 : i32, i32
  }
  func.func @transform_5(%arg0: i32) -> (i32, i32) {
    %c0_i32 = arith.constant 0 : i32
    %c0_i32_0 = arith.constant 0 : i32
    %c0_i32_1 = arith.constant 0 : i32
    return %c0_i32, %c0_i32_0 : i32, i32
  }
  func.func @transform_6(%arg0: i32) -> (i32, i32) {
    %c0_i32 = arith.constant 0 : i32
    %c0_i32_0 = arith.constant 0 : i32
    %c0_i32_1 = arith.constant 0 : i32
    return %c0_i32, %c0_i32_0 : i32, i32
  }
  func.func @transform_7(%arg0: i32) -> (i32, i32) {
    %c0_i32 = arith.constant 0 : i32
    %c0_i32_0 = arith.constant 0 : i32
    return %arg0, %c0_i32 : i32, i32
  }
}

</mosaic_0001>

<llo_original>
// kernel: tpu_custom_call.1
$region0: #{tpu_custom_call.1}
  #allocation0 [shape = 'u32[]', space=smem, size = 0x4, offset = 0x4, fixed_abs, tag = 'smem constant byte address 0x4 - core index']
  #allocation1 [shape = 'u32[144,128]{1,0:T(1,128)}', space=vmem, size = 0x12000, scoped, tag = 'internal scratch']
  #allocation2 [shape = 'f32[1,1]{1,0:T(1,128)S(6)}', space=smem, size = 0x200, scoped, tag = 'scoped memory for tpu_custom_call.1']
  %s0 = inlined_call_operand.hbm [shape: bf16[512,256], index: 0, kind: input, shape index: {}]
  %s1 = inlined_call_operand.hbm [shape: bf16[256,512], index: 1, kind: input, shape index: {}]
  %s2 = inlined_call_operand.vmem [shape: f32[1,512], index: 2, kind: input, shape index: {}]
  %s3 = inlined_call_operand.hbm [shape: bf16[512,256], index: 3, kind: input, shape index: {}]
  %s4 = inlined_call_operand.vmem [shape: f32[1,256], index: 4, kind: input, shape index: {}]
  %s5 = inlined_call_operand.vmem [shape: bf16[1,256], index: 5, kind: input, shape index: {}]
  %s6 = inlined_call_operand.<no memory space> [shape: f32[1,1], index: 6, kind: input, shape index: {}]
  %s7 = inlined_call_operand.vmem [shape: f32[512,1], index: 7, kind: output, shape index: {}]
  %s8 = sld [smem:[#allocation0]]
  $region73: #{tpu_custom_call.1} parent=0
    _
  %s10 = ssub.s32 1, %s8
  %s11 = scalar_select 0, %s10, %s8
  %12 = sst [smem:[#allocation2]] %s6
  $region1: #{tpu_custom_call.1} parent=0
    #allocation3 [shape = 'u8[262144]{0}', space=vmem, size = 0x40000, scoped, tag = 'input window, operand 0']
    #allocation4 [shape = 's32[2]{0}', space=sflag, size = 0x8, scoped, tag = 'scoped memory for tpu_custom_call.1']
    #allocation5 [shape = 'u8[262144]{0}', space=vmem, size = 0x40000, scoped, tag = 'input window, operand 1, single buffered']
    #allocation6 [shape = 's32[1]{0}', space=sflag, size = 0x4, scoped, tag = 'scoped memory for tpu_custom_call.1']
    #allocation7 [shape = 'u8[262144]{0}', space=vmem, size = 0x40000, scoped, tag = 'input window, operand 3, single buffered']
    %13 = vsyncpa [#allocation4], 0
    %s14 = scalar_lea.sflag [#allocation4], 1
    %15 = vsyncpa %s14, 0
    %16 = vsyncpa [#allocation6], 0
    loop: start=0, step=1, limit=4
    $region2: #{tpu_custom_call.1} parent=1 // loop_pre_header
      _
    $region3: #{tpu_custom_call.1} parent=1 // loop_header
      %s18 = sphi 0, %s22
      %p19 = scmp.ge.s32.totalorder %s18, 4
      %s28 = sphi 0, %s30
      %s31 = sphi 0, %s28
      %s32 = sphi 0, %s31
      %s48 = sphi 0, %s32
      %s52 = sphi 0, %s52
      %s54 = sphi 0, %s52
      %s55 = sphi 0, %s54
      %s69 = sphi 0, %s55
      %s73 = sphi 0, %s73
      %s75 = sphi 0, %s73
      %s76 = sphi 0, %s75
      %s90 = sphi 0, %s76
      %s94 = sphi 0, %s94
      %s96 = sphi 0, %s94
      %s97 = sphi 0, %s96
      %s111 = sphi 0, %s97
      %s115 = sphi 0, %s115
      %s117 = sphi 0, %s115
      %s118 = sphi 0, %s117
      %s132 = sphi 0, %s118
      %s136 = sphi 0, %s136
      %s138 = sphi 0, %s136
      %s139 = sphi 0, %s138
      %s153 = sphi 0, %s139
      %s157 = sphi 0, %s157
      %s159 = sphi 0, %s157
      %s160 = sphi 0, %s159
      %s174 = sphi 0, %s160
      %s180 = sphi 0, %s182
      %s183 = sphi 0, %s180
      %s184 = sphi 0, %s183
      %s200 = sphi 0, %s184
    $region4: #{tpu_custom_call.1} parent=1 // loop_header_branch
      %21 = sbr.rel (%p19) target = $region8
    $region5: #{tpu_custom_call.1} parent=1 // loop_body
      %s23 = ssub.s32 %s18, 1
      %s24 = ssub.s32 %s18, 2
      %s25 = sadd.s32 %s18, 1
      %s26 = ssub.s32 %s18, %s25
      %p27 = scmp.eq.s32.totalorder %s26, 0
      %s29 = sadd.s32 %s28, 1
      %s30 = scalar_select %p27, %s28, %s29
      %p33 = pneg %p27
      %p34 = scmp.eq.s32.totalorder %s18, 1
      %p35 = por %p33, %p34
      %p36 = scmp.ne.s32.totalorder %s28, %s31
      %p37 = scmp.eq.s32.totalorder %s18, 0
      %p38 = por %p36, %p37
      %p39 = scmp.ne.s32.totalorder %s28, %s31
      %p40 = scmp.eq.s32.totalorder %s23, 1
      %p41 = por %p39, %p40
      %p42 = scmp.ne.s32.totalorder %s31, %s32
      %p43 = scmp.eq.s32.totalorder %s23, 0
      %p44 = por %p42, %p43
      %p45 = scmp.ne.s32.totalorder %s31, %s32
      %p46 = scmp.eq.s32.totalorder %s24, 1
      %p47 = por %p45, %p46
      %p49 = scmp.ne.s32.totalorder %s32, %s48
      %p50 = scmp.eq.s32.totalorder %s24, 0
      %p51 = por %p49, %p50
      %s53 = sadd.s32 %s52, 1
      %p56 = scmp.eq.s32.totalorder %s18, 1
      %p57 = scmp.ne.s32.totalorder %s52, %s54
      %p58 = scmp.eq.s32.totalorder %s18, 0
      %p59 = por %p57, %p58
      %p60 = scmp.ne.s32.totalorder %s52, %s54
      %p61 = scmp.eq.s32.totalorder %s23, 1
      %p62 = por %p60, %p61
      %p63 = scmp.ne.s32.totalorder %s54, %s55
      %p64 = scmp.eq.s32.totalorder %s23, 0
      %p65 = por %p63, %p64
      %p66 = scmp.ne.s32.totalorder %s54, %s55
      %p67 = scmp.eq.s32.totalorder %s24, 1
      %p68 = por %p66, %p67
      %p70 = scmp.ne.s32.totalorder %s55, %s69
      %p71 = scmp.eq.s32.totalorder %s24, 0
      %p72 = por %p70, %p71
      %s74 = sadd.s32 %s73, 1
      %p77 = scmp.eq.s32.totalorder %s18, 1
      %p78 = scmp.ne.s32.totalorder %s73, %s75
      %p79 = scmp.eq.s32.totalorder %s18, 0
      %p80 = por %p78, %p79
      %p81 = scmp.ne.s32.totalorder %s73, %s75
      %p82 = scmp.eq.s32.totalorder %s23, 1
      %p83 = por %p81, %p82
      %p84 = scmp.ne.s32.totalorder %s75, %s76
      %p85 = scmp.eq.s32.totalorder %s23, 0
      %p86 = por %p84, %p85
      %p87 = scmp.ne.s32.totalorder %s75, %s76
      %p88 = scmp.eq.s32.totalorder %s24, 1
      %p89 = por %p87, %p88
      %p91 = scmp.ne.s32.totalorder %s76, %s90
      %p92 = scmp.eq.s32.totalorder %s24, 0
      %p93 = por %p91, %p92
      %s95 = sadd.s32 %s94, 1
      %p98 = scmp.eq.s32.totalorder %s18, 1
      %p99 = scmp.ne.s32.totalorder %s94, %s96
      %p100 = scmp.eq.s32.totalorder %s18, 0
      %p101 = por %p99, %p100
      %p102 = scmp.ne.s32.totalorder %s94, %s96
      %p103 = scmp.eq.s32.totalorder %s23, 1
      %p104 = por %p102, %p103
      %p105 = scmp.ne.s32.totalorder %s96, %s97
      %p106 = scmp.eq.s32.totalorder %s23, 0
      %p107 = por %p105, %p106
      %p108 = scmp.ne.s32.totalorder %s96, %s97
      %p109 = scmp.eq.s32.totalorder %s24, 1
      %p110 = por %p108, %p109
      %p112 = scmp.ne.s32.totalorder %s97, %s111
      %p113 = scmp.eq.s32.totalorder %s24, 0
      %p114 = por %p112, %p113
      %s116 = sadd.s32 %s115, 1
      %p119 = scmp.eq.s32.totalorder %s18, 1
      %p120 = scmp.ne.s32.totalorder %s115, %s117
      %p121 = scmp.eq.s32.totalorder %s18, 0
      %p122 = por %p120, %p121
      %p123 = scmp.ne.s32.totalorder %s115, %s117
      %p124 = scmp.eq.s32.totalorder %s23, 1
      %p125 = por %p123, %p124
      %p126 = scmp.ne.s32.totalorder %s117, %s118
      %p127 = scmp.eq.s32.totalorder %s23, 0
      %p128 = por %p126, %p127
      %p129 = scmp.ne.s32.totalorder %s117, %s118
      %p130 = scmp.eq.s32.totalorder %s24, 1
      %p131 = por %p129, %p130
      %p133 = scmp.ne.s32.totalorder %s118, %s132
      %p134 = scmp.eq.s32.totalorder %s24, 0
      %p135 = por %p133, %p134
      %s137 = sadd.s32 %s136, 1
      %p140 = scmp.eq.s32.totalorder %s18, 1
      %p141 = scmp.ne.s32.totalorder %s136, %s138
      %p142 = scmp.eq.s32.totalorder %s18, 0
      %p143 = por %p141, %p142
      %p144 = scmp.ne.s32.totalorder %s136, %s138
      %p145 = scmp.eq.s32.totalorder %s23, 1
      %p146 = por %p144, %p145
      %p147 = scmp.ne.s32.totalorder %s138, %s139
      %p148 = scmp.eq.s32.totalorder %s23, 0
      %p149 = por %p147, %p148
      %p150 = scmp.ne.s32.totalorder %s138, %s139
      %p151 = scmp.eq.s32.totalorder %s24, 1
      %p152 = por %p150, %p151
      %p154 = scmp.ne.s32.totalorder %s139, %s153
      %p155 = scmp.eq.s32.totalorder %s24, 0
      %p156 = por %p154, %p155
      %s158 = sadd.s32 %s157, 1
      %p161 = scmp.eq.s32.totalorder %s18, 1
      %p162 = scmp.ne.s32.totalorder %s157, %s159
      %p163 = scmp.eq.s32.totalorder %s18, 0
      %p164 = por %p162, %p163
      %p165 = scmp.ne.s32.totalorder %s157, %s159
      %p166 = scmp.eq.s32.totalorder %s23, 1
      %p167 = por %p165, %p166
      %p168 = scmp.ne.s32.totalorder %s159, %s160
      %p169 = scmp.eq.s32.totalorder %s23, 0
      %p170 = por %p168, %p169
      %p171 = scmp.ne.s32.totalorder %s159, %s160
      %p172 = scmp.eq.s32.totalorder %s24, 1
      %p173 = por %p171, %p172
      %p175 = scmp.ne.s32.totalorder %s160, %s174
      %p176 = scmp.eq.s32.totalorder %s24, 0
      %p177 = por %p175, %p176
      %s178 = ssub.s32 %s18, %s25
      %p179 = scmp.eq.s32.totalorder %s178, 0
      %s181 = sadd.s32 %s180, 1
      %s182 = scalar_select %p179, %s180, %s181
      %p185 = pneg %p179
      %p186 = scmp.eq.s32.totalorder %s18, 1
      %p187 = por %p185, %p186
      %p188 = scmp.ne.s32.totalorder %s180, %s183
      %p189 = scmp.eq.s32.totalorder %s18, 0
      %p190 = por %p188, %p189
      %p191 = scmp.ne.s32.totalorder %s180, %s183
      %p192 = scmp.eq.s32.totalorder %s23, 1
      %p193 = por %p191, %p192
      %p194 = scmp.ne.s32.totalorder %s183, %s184
      %p195 = scmp.eq.s32.totalorder %s23, 0
      %p196 = por %p194, %p195
      %p197 = scmp.ne.s32.totalorder %s183, %s184
      %p198 = scmp.eq.s32.totalorder %s24, 1
      %p199 = por %p197, %p198
      %p201 = scmp.ne.s32.totalorder %s184, %s200
      %p202 = scmp.eq.s32.totalorder %s24, 0
      %p203 = por %p201, %p202
      %p204 = scmp.le.s32.totalorder 1, %s18
      %p205 = scmp.lt.s32.totalorder %s18, 3
      %p206 = pnand %p204, %p205
      %p207 = pneg %p206
      // Predicated region
      $region9: #{tpu_custom_call.1} parent=5 // pred_check
        _
      $region10: #{tpu_custom_call.1} parent=5 // pred_check_branch
        %209 = sbr.rel (%p206) target = $region12
      $region11: #{tpu_custom_call.1} parent=5 // pred_region
        %s210 = ssub.s32 %s18, 1
        // Predicated region
        $region13: #{tpu_custom_call.1} parent=11 // pred_check
          %p211 = pneg %p65
        $region14: #{tpu_custom_call.1} parent=11 // pred_check_branch
          %213 = sbr.rel (%p211) target = $region16
        $region15: #{tpu_custom_call.1} parent=11 // pred_region
          %s215 = ssub.s32 8192, 8192
          %216 = vsyncadd [#allocation6], %s215
          %s217 = sshll.u32 [#allocation5], 4
          %s218 = int_to_ptr.vmem [resolvable:$true] %s217
          %223 = dma.hbm_to_vmem [thread:$0]  %s1, 8192, %s218, [#allocation6], 256, 256, 16
        $region16: #{tpu_custom_call.1} parent=11 // pred_fallthru
          _
        // Predicated region
        $region17: #{tpu_custom_call.1} parent=11 // pred_check
          %p224 = pneg %p86
        $region18: #{tpu_custom_call.1} parent=11 // pred_check_branch
          %226 = sbr.rel (%p224) target = $region20
        $region19: #{tpu_custom_call.1} parent=11 // pred_region
          _
        $region20: #{tpu_custom_call.1} parent=11 // pred_fallthru
          _
        // Predicated region
        $region21: #{tpu_custom_call.1} parent=11 // pred_check
          %p227 = pneg %p107
        $region22: #{tpu_custom_call.1} parent=11 // pred_check_branch
          %229 = sbr.rel (%p227) target = $region24
        $region23: #{tpu_custom_call.1} parent=11 // pred_region
          %s231 = ssub.s32 8192, 8192
          %232 = vsyncadd [#allocation6], %s231
          %s233 = sshll.u32 [#allocation7], 4
          %s234 = int_to_ptr.vmem [resolvable:$true] %s233
          %239 = dma.hbm_to_vmem [thread:$0]  %s3, 8192, %s234, [#allocation6], 128, 128, 8
        $region24: #{tpu_custom_call.1} parent=11 // pred_fallthru
          _
        // Predicated region
        $region25: #{tpu_custom_call.1} parent=11 // pred_check
          %p240 = pneg %p128
        $region26: #{tpu_custom_call.1} parent=11 // pred_check_branch
          %242 = sbr.rel (%p240) target = $region28
        $region27: #{tpu_custom_call.1} parent=11 // pred_region
          _
        $region28: #{tpu_custom_call.1} parent=11 // pred_fallthru
          _
        // Predicated region
        $region29: #{tpu_custom_call.1} parent=11 // pred_check
          %p243 = pneg %p149
        $region30: #{tpu_custom_call.1} parent=11 // pred_check_branch
          %245 = sbr.rel (%p243) target = $region32
        $region31: #{tpu_custom_call.1} parent=11 // pred_region
          _
        $region32: #{tpu_custom_call.1} parent=11 // pred_fallthru
          _
        // Predicated region
        $region33: #{tpu_custom_call.1} parent=11 // pred_check
          %p246 = pneg %p170
        $region34: #{tpu_custom_call.1} parent=11 // pred_check_branch
          %248 = sbr.rel (%p246) target = $region36
        $region35: #{tpu_custom_call.1} parent=11 // pred_region
          _
        $region36: #{tpu_custom_call.1} parent=11 // pred_fallthru
          _
      $region12: #{tpu_custom_call.1} parent=5 // pred_fallthru
        _
      %p249 = scmp.lt.s32.totalorder %s18, 2
      // Predicated region
      $region37: #{tpu_custom_call.1} parent=5 // pred_check
        %p250 = pneg %p249
      $region38: #{tpu_custom_call.1} parent=5 // pred_check_branch
        %252 = sbr.rel (%p250) target = $region40
      $region39: #{tpu_custom_call.1} parent=5 // pred_region
        // Predicated region
        $region41: #{tpu_custom_call.1} parent=39 // pred_check
          %p253 = pneg %p38
        $region42: #{tpu_custom_call.1} parent=39 // pred_check_branch
          %255 = sbr.rel (%p253) target = $region44
        $region43: #{tpu_custom_call.1} parent=39 // pred_region
          %s256 = sand.u32 %s28, 1
          %s257 = scalar_lea.sflag [#allocation4], %s256
          %s258 = sand.u32 %s28, 1
          %s259 = smul.addr %s258, 256
          %s260 = scalar_lea.vmem [#allocation3], %s259
          %s261 = smul.u32 32, %s18
          %s263 = ssub.s32 4096, 4096
          %264 = vsyncadd %s257, %s263
          %s265 = smul.addr %s261, 2
          %s266 = smul.addr %s265, 64
          %s267 = scalar_lea.hbm %s0, %s266
          %s268 = sshll.u32 %s260, 4
          %s269 = int_to_ptr.vmem [resolvable:$true] %s268
          %274 = dma.hbm_to_vmem [thread:$0]  %s267, 4096, %s269, %s257, 128, 128, 8
        $region44: #{tpu_custom_call.1} parent=39 // pred_fallthru
          _
      $region40: #{tpu_custom_call.1} parent=5 // pred_fallthru
        _
      %p275 = scmp.le.s32.totalorder 1, %s18
      %p276 = scmp.lt.s32.totalorder %s18, 3
      %p277 = pnand %p275, %p276
      %p278 = pneg %p277
      // Predicated region
      $region45: #{tpu_custom_call.1} parent=5 // pred_check
        _
      $region46: #{tpu_custom_call.1} parent=5 // pred_check_branch
        %280 = sbr.rel (%p277) target = $region48
      $region47: #{tpu_custom_call.1} parent=5 // pred_region
        %s281 = ssub.s32 %s18, 1
        %s282 = sand.u32 %s31, 1
        %s283 = scalar_lea.sflag [#allocation4], %s282
        %s284 = sand.u32 %s31, 1
        %s285 = smul.addr %s284, 256
        %s286 = scalar_lea.vmem [#allocation3], %s285
        // Predicated region
        $region49: #{tpu_custom_call.1} parent=47 // pred_check
          %p287 = pneg %p44
        $region50: #{tpu_custom_call.1} parent=47 // pred_check_branch
          %289 = sbr.rel (%p287) target = $region52
        $region51: #{tpu_custom_call.1} parent=47 // pred_region
          %290 = dma.done %s283, 4096
        $region52: #{tpu_custom_call.1} parent=47 // pred_fallthru
          _
        // Predicated region
        $region53: #{tpu_custom_call.1} parent=47 // pred_check
          %p291 = pneg %p65
        $region54: #{tpu_custom_call.1} parent=47 // pred_check_branch
          %293 = sbr.rel (%p291) target = $region56
        $region55: #{tpu_custom_call.1} parent=47 // pred_region
          %294 = dma.done [#allocation6], 8192
        $region56: #{tpu_custom_call.1} parent=47 // pred_fallthru
          _
        // Predicated region
        $region57: #{tpu_custom_call.1} parent=47 // pred_check
          %p295 = pneg %p107
        $region58: #{tpu_custom_call.1} parent=47 // pred_check_branch
          %297 = sbr.rel (%p295) target = $region60
        $region59: #{tpu_custom_call.1} parent=47 // pred_region
          %298 = dma.done [#allocation6], 8192
        $region60: #{tpu_custom_call.1} parent=47 // pred_fallthru
          _
        %s299 = sand.u32 %s31, 1
        %s300 = scalar_lea.sflag [#allocation4], %s299
        %s301 = sand.u32 %s31, 1
        %s302 = smul.addr %s301, 256
        %s303 = scalar_lea.vmem [#allocation3], %s302
        %p304 = pneg %p44
        %p305 = pneg %p41
        %p306 = pneg %p65
        %p307 = pneg %p62
        %p308 = pneg %p86
        %p309 = pneg %p83
        %p310 = pneg %p107
        %p311 = pneg %p104
        %p312 = pneg %p128
        %p313 = pneg %p125
        %p314 = pneg %p149
        %p315 = pneg %p146
        %p316 = pneg %p170
        %p317 = pneg %p167
        %p318 = pneg %p196
        %p319 = pneg %p193
        %s320 = smul.u32 32, %s23
        %p321 = scmp.lt.s32.totalorder %s320, 63
        %s322 = scalar_select %p321, %s320, 63
        %s323 = smul.addr %s322, 8
        %s324 = scalar_lea.vmem %s7, %s323
        %s325 = smul.u32 32, %s23
        %s326 = smul.u32 32, %s23
        %p327 = scmp.lt.s32.totalorder %s326, 63
        %s328 = scalar_select %p327, %s326, 63
        %s329 = smul.addr %s328, 8
        %s330 = scalar_lea.vmem %s7, %s329
        %s331 = smul.u32 32, %s23
        %v332 = vld [vmem:[%s286] sm:$0xff]
        %v333 = vld [vmem:[%s286 + $0x8] sm:$0xff]
        %v334 = vld [vmem:[%s286 + $0x10] sm:$0xff]
        %v335 = vld [vmem:[%s286 + $0x18] sm:$0xff]
        %v336 = vld [vmem:[%s286 + $0x20] sm:$0xff]
        %v337 = vld [vmem:[%s286 + $0x28] sm:$0xff]
        %v338 = vld [vmem:[%s286 + $0x30] sm:$0xff]
        %v339 = vld [vmem:[%s286 + $0x38] sm:$0xff]
        %v340 = vld [vmem:[%s286 + $0x40] sm:$0xff]
        %v341 = vld [vmem:[%s286 + $0x48] sm:$0xff]
        %v342 = vld [vmem:[%s286 + $0x50] sm:$0xff]
        %v343 = vld [vmem:[%s286 + $0x58] sm:$0xff]
        %v344 = vld [vmem:[%s286 + $0x60] sm:$0xff]
        %v345 = vld [vmem:[%s286 + $0x68] sm:$0xff]
        %v346 = vld [vmem:[%s286 + $0x70] sm:$0xff]
        %v347 = vld [vmem:[%s286 + $0x78] sm:$0xff]
        %v348 = vld [vmem:[%s286 + $0x80] sm:$0xff]
        %v349 = vld [vmem:[%s286 + $0x88] sm:$0xff]
        %v350 = vld [vmem:[%s286 + $0x90] sm:$0xff]
        %v351 = vld [vmem:[%s286 + $0x98] sm:$0xff]
        %v352 = vld [vmem:[%s286 + $0xa0] sm:$0xff]
        %v353 = vld [vmem:[%s286 + $0xa8] sm:$0xff]
        %v354 = vld [vmem:[%s286 + $0xb0] sm:$0xff]
        %v355 = vld [vmem:[%s286 + $0xb8] sm:$0xff]
        %v356 = vld [vmem:[%s286 + $0xc0] sm:$0xff]
        %v357 = vld [vmem:[%s286 + $0xc8] sm:$0xff]
        %v358 = vld [vmem:[%s286 + $0xd0] sm:$0xff]
        %v359 = vld [vmem:[%s286 + $0xd8] sm:$0xff]
        %v360 = vld [vmem:[%s286 + $0xe0] sm:$0xff]
        %v361 = vld [vmem:[%s286 + $0xe8] sm:$0xff]
        %v362 = vld [vmem:[%s286 + $0xf0] sm:$0xff]
        %v363 = vld [vmem:[%s286 + $0xf8] sm:$0xff]
        %v364 = vld [vmem:[#allocation5] sm:$0xff]
        %v365 = vld [vmem:[#allocation5 + $0x8] sm:$0xff]
        %v366 = vld [vmem:[#allocation5 + $0x10] sm:$0xff]
        %v367 = vld [vmem:[#allocation5 + $0x18] sm:$0xff]
        %v368 = vld [vmem:[#allocation5 + $0x20] sm:$0xff]
        %v369 = vld [vmem:[#allocation5 + $0x28] sm:$0xff]
        %v370 = vld [vmem:[#allocation5 + $0x30] sm:$0xff]
        %v371 = vld [vmem:[#allocation5 + $0x38] sm:$0xff]
        %v372 = vld [vmem:[#allocation5 + $0x40] sm:$0xff]
        %v373 = vld [vmem:[#allocation5 + $0x48] sm:$0xff]
        %v374 = vld [vmem:[#allocation5 + $0x50] sm:$0xff]
        %v375 = vld [vmem:[#allocation5 + $0x58] sm:$0xff]
        %v376 = vld [vmem:[#allocation5 + $0x60] sm:$0xff]
        %v377 = vld [vmem:[#allocation5 + $0x68] sm:$0xff]
        %v378 = vld [vmem:[#allocation5 + $0x70] sm:$0xff]
        %v379 = vld [vmem:[#allocation5 + $0x78] sm:$0xff]
        %v380 = vld [vmem:[#allocation5 + $0x80] sm:$0xff]
        %v381 = vld [vmem:[#allocation5 + $0x88] sm:$0xff]
        %v382 = vld [vmem:[#allocation5 + $0x90] sm:$0xff]
        %v383 = vld [vmem:[#allocation5 + $0x98] sm:$0xff]
        %v384 = vld [vmem:[#allocation5 + $0xa0] sm:$0xff]
        %v385 = vld [vmem:[#allocation5 + $0xa8] sm:$0xff]
        %v386 = vld [vmem:[#allocation5 + $0xb0] sm:$0xff]
        %v387 = vld [vmem:[#allocation5 + $0xb8] sm:$0xff]
        %v388 = vld [vmem:[#allocation5 + $0xc0] sm:$0xff]
        %v389 = vld [vmem:[#allocation5 + $0xc8] sm:$0xff]
        %v390 = vld [vmem:[#allocation5 + $0xd0] sm:$0xff]
        %v391 = vld [vmem:[#allocation5 + $0xd8] sm:$0xff]
        %v392 = vld [vmem:[#allocation5 + $0xe0] sm:$0xff]
        %v393 = vld [vmem:[#allocation5 + $0xe8] sm:$0xff]
        %v394 = vld [vmem:[#allocation5 + $0xf0] sm:$0xff]
        %v395 = vld [vmem:[#allocation5 + $0xf8] sm:$0xff]
        %v396 = vld [vmem:[#allocation5 + $0x100] sm:$0xff]
        %v397 = vld [vmem:[#allocation5 + $0x108] sm:$0xff]
        %v398 = vld [vmem:[#allocation5 + $0x110] sm:$0xff]
        %v399 = vld [vmem:[#allocation5 + $0x118] sm:$0xff]
        %v400 = vld [vmem:[#allocation5 + $0x120] sm:$0xff]
        %v401 = vld [vmem:[#allocation5 + $0x128] sm:$0xff]
        %v402 = vld [vmem:[#allocation5 + $0x130] sm:$0xff]
        %v403 = vld [vmem:[#allocation5 + $0x138] sm:$0xff]
        %v404 = vld [vmem:[#allocation5 + $0x140] sm:$0xff]
        %v405 = vld [vmem:[#allocation5 + $0x148] sm:$0xff]
        %v406 = vld [vmem:[#allocation5 + $0x150] sm:$0xff]
        %v407 = vld [vmem:[#allocation5 + $0x158] sm:$0xff]
        %v408 = vld [vmem:[#allocation5 + $0x160] sm:$0xff]
        %v409 = vld [vmem:[#allocation5 + $0x168] sm:$0xff]
        %v410 = vld [vmem:[#allocation5 + $0x170] sm:$0xff]
        %v411 = vld [vmem:[#allocation5 + $0x178] sm:$0xff]
        %v412 = vld [vmem:[#allocation5 + $0x180] sm:$0xff]
        %v413 = vld [vmem:[#allocation5 + $0x188] sm:$0xff]
        %v414 = vld [vmem:[#allocation5 + $0x190] sm:$0xff]
        %v415 = vld [vmem:[#allocation5 + $0x198] sm:$0xff]
        %v416 = vld [vmem:[#allocation5 + $0x1a0] sm:$0xff]
        %v417 = vld [vmem:[#allocation5 + $0x1a8] sm:$0xff]
        %v418 = vld [vmem:[#allocation5 + $0x1b0] sm:$0xff]
        %v419 = vld [vmem:[#allocation5 + $0x1b8] sm:$0xff]
        %v420 = vld [vmem:[#allocation5 + $0x1c0] sm:$0xff]
        %v421 = vld [vmem:[#allocation5 + $0x1c8] sm:$0xff]
        %v422 = vld [vmem:[#allocation5 + $0x1d0] sm:$0xff]
        %v423 = vld [vmem:[#allocation5 + $0x1d8] sm:$0xff]
        %v424 = vld [vmem:[#allocation5 + $0x1e0] sm:$0xff]
        %v425 = vld [vmem:[#allocation5 + $0x1e8] sm:$0xff]
        %v426 = vld [vmem:[#allocation5 + $0x1f0] sm:$0xff]
        %v427 = vld [vmem:[#allocation5 + $0x1f8] sm:$0xff]
        %v428 = vld [vmem:[%s2] sm:$0xf]
        %v430 = vlaneseq
        %v431 = vshrl.u32 %v430, 7
        %v432 = vsub.s32 0, %v431
        %v433 = vrot.slane %v428, %v432
        %v434 = vlaneseq
        %v435 = vshrl.u32 %v434, 7
        %v436 = vsub.s32 1, %v435
        %v437 = vrot.slane %v428, %v436
        %v438 = vlaneseq
        %v439 = vshrl.u32 %v438, 7
        %v440 = vsub.s32 2, %v439
        %v441 = vrot.slane %v428, %v440
        %v442 = vlaneseq
        %v443 = vshrl.u32 %v442, 7
        %v444 = vsub.s32 3, %v443
        %v445 = vrot.slane %v428, %v444
        %v482 = vunpack.c.l.b16 %v332
        %v483 = vunpack.c.h.b16 %v332
        %v484 = vunpack.c.l.b16 %v333
        %v485 = vunpack.c.h.b16 %v333
        %v486 = vunpack.c.l.b16 %v334
        %v487 = vunpack.c.h.b16 %v334
        %v488 = vunpack.c.l.b16 %v335
        %v489 = vunpack.c.h.b16 %v335
        %v490 = vunpack.c.l.b16 %v336
        %v491 = vunpack.c.h.b16 %v336
        %v492 = vunpack.c.l.b16 %v337
        %v493 = vunpack.c.h.b16 %v337
        %v494 = vunpack.c.l.b16 %v338
        %v495 = vunpack.c.h.b16 %v338
        %v496 = vunpack.c.l.b16 %v339
        %v497 = vunpack.c.h.b16 %v339
        %v498 = vunpack.c.l.b16 %v340
        %v499 = vunpack.c.h.b16 %v340
        %v500 = vunpack.c.l.b16 %v341
        %v501 = vunpack.c.h.b16 %v341
        %v502 = vunpack.c.l.b16 %v342
        %v503 = vunpack.c.h.b16 %v342
        %v504 = vunpack.c.l.b16 %v343
        %v505 = vunpack.c.h.b16 %v343
        %v506 = vunpack.c.l.b16 %v344
        %v507 = vunpack.c.h.b16 %v344
        %v508 = vunpack.c.l.b16 %v345
        %v509 = vunpack.c.h.b16 %v345
        %v510 = vunpack.c.l.b16 %v346
        %v511 = vunpack.c.h.b16 %v346
        %v512 = vunpack.c.l.b16 %v347
        %v513 = vunpack.c.h.b16 %v347
        %v514 = vunpack.c.l.b16 %v348
        %v515 = vunpack.c.h.b16 %v348
        %v516 = vunpack.c.l.b16 %v349
        %v517 = vunpack.c.h.b16 %v349
        %v518 = vunpack.c.l.b16 %v350
        %v519 = vunpack.c.h.b16 %v350
        %v520 = vunpack.c.l.b16 %v351
        %v521 = vunpack.c.h.b16 %v351
        %v522 = vunpack.c.l.b16 %v352
        %v523 = vunpack.c.h.b16 %v352
        %v524 = vunpack.c.l.b16 %v353
        %v525 = vunpack.c.h.b16 %v353
        %v526 = vunpack.c.l.b16 %v354
        %v527 = vunpack.c.h.b16 %v354
        %v528 = vunpack.c.l.b16 %v355
        %v529 = vunpack.c.h.b16 %v355
        %v530 = vunpack.c.l.b16 %v356
        %v531 = vunpack.c.h.b16 %v356
        %v532 = vunpack.c.l.b16 %v357
        %v533 = vunpack.c.h.b16 %v357
        %v534 = vunpack.c.l.b16 %v358
        %v535 = vunpack.c.h.b16 %v358
        %v536 = vunpack.c.l.b16 %v359
        %v537 = vunpack.c.h.b16 %v359
        %v538 = vunpack.c.l.b16 %v360
        %v539 = vunpack.c.h.b16 %v360
        %v540 = vunpack.c.l.b16 %v361
        %v541 = vunpack.c.h.b16 %v361
        %v542 = vunpack.c.l.b16 %v362
        %v543 = vunpack.c.h.b16 %v362
        %v544 = vunpack.c.l.b16 %v363
        %v545 = vunpack.c.h.b16 %v363
        %v546 = vpack.c.b16 %v484, %v482
        %v547 = vpack.c.b16 %v485, %v483
        %v548 = vpack.c.b16 %v488, %v486
        %v549 = vpack.c.b16 %v489, %v487
        %v550 = vpack.c.b16 %v492, %v490
        %v551 = vpack.c.b16 %v493, %v491
        %v552 = vpack.c.b16 %v496, %v494
        %v553 = vpack.c.b16 %v497, %v495
        %v554 = vpack.c.b16 %v500, %v498
        %v555 = vpack.c.b16 %v501, %v499
        %v556 = vpack.c.b16 %v504, %v502
        %v557 = vpack.c.b16 %v505, %v503
        %v558 = vpack.c.b16 %v508, %v506
        %v559 = vpack.c.b16 %v509, %v507
        %v560 = vpack.c.b16 %v512, %v510
        %v561 = vpack.c.b16 %v513, %v511
        %v562 = vpack.c.b16 %v516, %v514
        %v563 = vpack.c.b16 %v517, %v515
        %v564 = vpack.c.b16 %v520, %v518
        %v565 = vpack.c.b16 %v521, %v519
        %v566 = vpack.c.b16 %v524, %v522
        %v567 = vpack.c.b16 %v525, %v523
        %v568 = vpack.c.b16 %v528, %v526
        %v569 = vpack.c.b16 %v529, %v527
        %v570 = vpack.c.b16 %v532, %v530
        %v571 = vpack.c.b16 %v533, %v531
        %v572 = vpack.c.b16 %v536, %v534
        %v573 = vpack.c.b16 %v537, %v535
        %v574 = vpack.c.b16 %v540, %v538
        %v575 = vpack.c.b16 %v541, %v539
        %v576 = vpack.c.b16 %v544, %v542
        %v577 = vpack.c.b16 %v545, %v543
        %v674 = vunpack.c.l.b16 %v364
        %v675 = vunpack.c.h.b16 %v364
        %v676 = vunpack.c.l.b16 %v365
        %v677 = vunpack.c.h.b16 %v365
        %v678 = vunpack.c.l.b16 %v366
        %v679 = vunpack.c.h.b16 %v366
        %v680 = vunpack.c.l.b16 %v367
        %v681 = vunpack.c.h.b16 %v367
        %v682 = vunpack.c.l.b16 %v368
        %v683 = vunpack.c.h.b16 %v368
        %v684 = vunpack.c.l.b16 %v369
        %v685 = vunpack.c.h.b16 %v369
        %v686 = vunpack.c.l.b16 %v370
        %v687 = vunpack.c.h.b16 %v370
        %v688 = vunpack.c.l.b16 %v371
        %v689 = vunpack.c.h.b16 %v371
        %v690 = vunpack.c.l.b16 %v372
        %v691 = vunpack.c.h.b16 %v372
        %v692 = vunpack.c.l.b16 %v373
        %v693 = vunpack.c.h.b16 %v373
        %v694 = vunpack.c.l.b16 %v374
        %v695 = vunpack.c.h.b16 %v374
        %v696 = vunpack.c.l.b16 %v375
        %v697 = vunpack.c.h.b16 %v375
        %v698 = vunpack.c.l.b16 %v376
        %v699 = vunpack.c.h.b16 %v376
        %v700 = vunpack.c.l.b16 %v377
        %v701 = vunpack.c.h.b16 %v377
        %v702 = vunpack.c.l.b16 %v378
        %v703 = vunpack.c.h.b16 %v378
        %v704 = vunpack.c.l.b16 %v379
        %v705 = vunpack.c.h.b16 %v379
        %v706 = vunpack.c.l.b16 %v380
        %v707 = vunpack.c.h.b16 %v380
        %v708 = vunpack.c.l.b16 %v381
        %v709 = vunpack.c.h.b16 %v381
        %v710 = vunpack.c.l.b16 %v382
        %v711 = vunpack.c.h.b16 %v382
        %v712 = vunpack.c.l.b16 %v383
        %v713 = vunpack.c.h.b16 %v383
        %v714 = vunpack.c.l.b16 %v384
        %v715 = vunpack.c.h.b16 %v384
        %v716 = vunpack.c.l.b16 %v385
        %v717 = vunpack.c.h.b16 %v385
        %v718 = vunpack.c.l.b16 %v386
        %v719 = vunpack.c.h.b16 %v386
        %v720 = vunpack.c.l.b16 %v387
        %v721 = vunpack.c.h.b16 %v387
        %v722 = vunpack.c.l.b16 %v388
        %v723 = vunpack.c.h.b16 %v388
        %v724 = vunpack.c.l.b16 %v389
        %v725 = vunpack.c.h.b16 %v389
        %v726 = vunpack.c.l.b16 %v390
        %v727 = vunpack.c.h.b16 %v390
        %v728 = vunpack.c.l.b16 %v391
        %v729 = vunpack.c.h.b16 %v391
        %v730 = vunpack.c.l.b16 %v392
        %v731 = vunpack.c.h.b16 %v392
        %v732 = vunpack.c.l.b16 %v393
        %v733 = vunpack.c.h.b16 %v393
        %v734 = vunpack.c.l.b16 %v394
        %v735 = vunpack.c.h.b16 %v394
        %v736 = vunpack.c.l.b16 %v395
        %v737 = vunpack.c.h.b16 %v395
        %v738 = vunpack.c.l.b16 %v396
        %v739 = vunpack.c.h.b16 %v396
        %v740 = vunpack.c.l.b16 %v397
        %v741 = vunpack.c.h.b16 %v397
        %v742 = vunpack.c.l.b16 %v398
        %v743 = vunpack.c.h.b16 %v398
        %v744 = vunpack.c.l.b16 %v399
        %v745 = vunpack.c.h.b16 %v399
        %v746 = vunpack.c.l.b16 %v400
        %v747 = vunpack.c.h.b16 %v400
        %v748 = vunpack.c.l.b16 %v401
        %v749 = vunpack.c.h.b16 %v401
        %v750 = vunpack.c.l.b16 %v402
        %v751 = vunpack.c.h.b16 %v402
        %v752 = vunpack.c.l.b16 %v403
        %v753 = vunpack.c.h.b16 %v403
        %v754 = vunpack.c.l.b16 %v404
        %v755 = vunpack.c.h.b16 %v404
        %v756 = vunpack.c.l.b16 %v405
        %v757 = vunpack.c.h.b16 %v405
        %v758 = vunpack.c.l.b16 %v406
        %v759 = vunpack.c.h.b16 %v406
        %v760 = vunpack.c.l.b16 %v407
        %v761 = vunpack.c.h.b16 %v407
        %v762 = vunpack.c.l.b16 %v408
        %v763 = vunpack.c.h.b16 %v408
        %v764 = vunpack.c.l.b16 %v409
        %v765 = vunpack.c.h.b16 %v409
        %v766 = vunpack.c.l.b16 %v410
        %v767 = vunpack.c.h.b16 %v410
        %v768 = vunpack.c.l.b16 %v411
        %v769 = vunpack.c.h.b16 %v411
        %v770 = vunpack.c.l.b16 %v412
        %v771 = vunpack.c.h.b16 %v412
        %v772 = vunpack.c.l.b16 %v413
        %v773 = vunpack.c.h.b16 %v413
        %v774 = vunpack.c.l.b16 %v414
        %v775 = vunpack.c.h.b16 %v414
        %v776 = vunpack.c.l.b16 %v415
        %v777 = vunpack.c.h.b16 %v415
        %v778 = vunpack.c.l.b16 %v416
        %v779 = vunpack.c.h.b16 %v416
        %v780 = vunpack.c.l.b16 %v417
        %v781 = vunpack.c.h.b16 %v417
        %v782 = vunpack.c.l.b16 %v418
        %v783 = vunpack.c.h.b16 %v418
        %v784 = vunpack.c.l.b16 %v419
        %v785 = vunpack.c.h.b16 %v419
        %v786 = vunpack.c.l.b16 %v420
        %v787 = vunpack.c.h.b16 %v420
        %v788 = vunpack.c.l.b16 %v421
        %v789 = vunpack.c.h.b16 %v421
        %v790 = vunpack.c.l.b16 %v422
        %v791 = vunpack.c.h.b16 %v422
        %v792 = vunpack.c.l.b16 %v423
        %v793 = vunpack.c.h.b16 %v423
        %v794 = vunpack.c.l.b16 %v424
        %v795 = vunpack.c.h.b16 %v424
        %v796 = vunpack.c.l.b16 %v425
        %v797 = vunpack.c.h.b16 %v425
        %v798 = vunpack.c.l.b16 %v426
        %v799 = vunpack.c.h.b16 %v426
        %v800 = vunpack.c.l.b16 %v427
        %v801 = vunpack.c.h.b16 %v427
        %v802 = vpack.c.b16 %v678, %v674
        %v803 = vpack.c.b16 %v679, %v675
        %v804 = vpack.c.b16 %v680, %v676
        %v805 = vpack.c.b16 %v681, %v677
        %v806 = vpack.c.b16 %v686, %v682
        %v807 = vpack.c.b16 %v687, %v683
        %v808 = vpack.c.b16 %v688, %v684
        %v809 = vpack.c.b16 %v689, %v685
        %v810 = vpack.c.b16 %v694, %v690
        %v811 = vpack.c.b16 %v695, %v691
        %v812 = vpack.c.b16 %v696, %v692
        %v813 = vpack.c.b16 %v697, %v693
        %v814 = vpack.c.b16 %v702, %v698
        %v815 = vpack.c.b16 %v703, %v699
        %v816 = vpack.c.b16 %v704, %v700
        %v817 = vpack.c.b16 %v705, %v701
        %v818 = vpack.c.b16 %v710, %v706
        %v819 = vpack.c.b16 %v711, %v707
        %v820 = vpack.c.b16 %v712, %v708
        %v821 = vpack.c.b16 %v713, %v709
        %v822 = vpack.c.b16 %v718, %v714
        %v823 = vpack.c.b16 %v719, %v715
        %v824 = vpack.c.b16 %v720, %v716
        %v825 = vpack.c.b16 %v721, %v717
        %v826 = vpack.c.b16 %v726, %v722
        %v827 = vpack.c.b16 %v727, %v723
        %v828 = vpack.c.b16 %v728, %v724
        %v829 = vpack.c.b16 %v729, %v725
        %v830 = vpack.c.b16 %v734, %v730
        %v831 = vpack.c.b16 %v735, %v731
        %v832 = vpack.c.b16 %v736, %v732
        %v833 = vpack.c.b16 %v737, %v733
        %v834 = vpack.c.b16 %v742, %v738
        %v835 = vpack.c.b16 %v743, %v739
        %v836 = vpack.c.b16 %v744, %v740
        %v837 = vpack.c.b16 %v745, %v741
        %v838 = vpack.c.b16 %v750, %v746
        %v839 = vpack.c.b16 %v751, %v747
        %v840 = vpack.c.b16 %v752, %v748
        %v841 = vpack.c.b16 %v753, %v749
        %v842 = vpack.c.b16 %v758, %v754
        %v843 = vpack.c.b16 %v759, %v755
        %v844 = vpack.c.b16 %v760, %v756
        %v845 = vpack.c.b16 %v761, %v757
        %v846 = vpack.c.b16 %v766, %v762
        %v847 = vpack.c.b16 %v767, %v763
        %v848 = vpack.c.b16 %v768, %v764
        %v849 = vpack.c.b16 %v769, %v765
        %v850 = vpack.c.b16 %v774, %v770
        %v851 = vpack.c.b16 %v775, %v771
        %v852 = vpack.c.b16 %v776, %v772
        %v853 = vpack.c.b16 %v777, %v773
        %v854 = vpack.c.b16 %v782, %v778
        %v855 = vpack.c.b16 %v783, %v779
        %v856 = vpack.c.b16 %v784, %v780
        %v857 = vpack.c.b16 %v785, %v781
        %v858 = vpack.c.b16 %v790, %v786
        %v859 = vpack.c.b16 %v791, %v787
        %v860 = vpack.c.b16 %v792, %v788
        %v861 = vpack.c.b16 %v793, %v789
        %v862 = vpack.c.b16 %v798, %v794
        %v863 = vpack.c.b16 %v799, %v795
        %v864 = vpack.c.b16 %v800, %v796
        %v865 = vpack.c.b16 %v801, %v797
        %930 = vmatprep.subr.bf16.mxu0 %v831
        %931 = vmatpush1.bf16.msra.mxu0 %v830
        %932 = vmatprep.subr.bf16.mxu0 %v827
        %933 = vmatpush1.bf16.msra.mxu0 %v826
        %934 = vmatprep.subr.bf16.mxu0 %v823
        %935 = vmatpush1.bf16.msra.mxu0 %v822
        %936 = vmatprep.subr.bf16.mxu0 %v819
        %937 = vmatpush1.bf16.msra.mxu0 %v818
        %938 = vmatprep.subr.bf16.mxu0 %v815
        %939 = vmatpush1.bf16.msra.mxu0 %v814
        %940 = vmatprep.subr.bf16.mxu0 %v811
        %941 = vmatpush1.bf16.msra.mxu0 %v810
        %942 = vmatprep.subr.bf16.mxu0 %v807
        %943 = vmatpush1.bf16.msra.mxu0 %v806
        %944 = vmatprep.subr.bf16.mxu0 %v803
        %945 = vmatpush1.bf16.msra.mxu0 %v802
        %946 = vmatprep.subr.bf16.mxu0 %v863
        %947 = vmatpush2.bf16.msra.mxu0 %v862
        %948 = vmatprep.subr.bf16.mxu0 %v859
        %949 = vmatpush2.bf16.msra.mxu0 %v858
        %950 = vmatprep.subr.bf16.mxu0 %v855
        %951 = vmatpush2.bf16.msra.mxu0 %v854
        %952 = vmatprep.subr.bf16.mxu0 %v851
        %953 = vmatpush2.bf16.msra.mxu0 %v850
        %954 = vmatprep.subr.bf16.mxu0 %v847
        %955 = vmatpush2.bf16.msra.mxu0 %v846
        %956 = vmatprep.subr.bf16.mxu0 %v843
        %957 = vmatpush2.bf16.msra.mxu0 %v842
        %958 = vmatprep.subr.bf16.mxu0 %v839
        %959 = vmatpush2.bf16.msra.mxu0 %v838
        %960 = vmatprep.subr.bf16.mxu0 %v835
        %961 = vmatpush2.bf16.msra.mxu0 %v834
        %962 = vmatprep.mubr.bf16.mxu0 %v547
        %963 = vmatmul.mubr.bf16.gmra.mxu0 %v546
        %v964 = vpop.f32.mrf.mxu0
        %v965 = vadd.f32 %v433, %v964
        %v966 = vpop.f32.mrf.mxu0
        %v967 = vadd.f32 %v437, %v966
        %v968 = vpop.f32.mrf.mxu0
        %v969 = vadd.f32 %v433, %v968
        %v970 = vpop.f32.mrf.mxu0
        %v971 = vadd.f32 %v437, %v970
        %972 = vmatprep.mubr.bf16.mxu0 %v549
        %973 = vmatmul.mubr.bf16.gmra.mxu0 %v548
        %v974 = vpop.f32.mrf.mxu0
        %v975 = vadd.f32 %v433, %v974
        %v976 = vpop.f32.mrf.mxu0
        %v977 = vadd.f32 %v437, %v976
        %v978 = vpop.f32.mrf.mxu0
        %v979 = vadd.f32 %v433, %v978
        %v980 = vpop.f32.mrf.mxu0
        %v981 = vadd.f32 %v437, %v980
        %982 = vmatprep.mubr.bf16.mxu0 %v551
        %983 = vmatmul.mubr.bf16.gmra.mxu0 %v550
        %v984 = vpop.f32.mrf.mxu0
        %v985 = vadd.f32 %v433, %v984
        %v986 = vpop.f32.mrf.mxu0
        %v987 = vadd.f32 %v437, %v986
        %v988 = vpop.f32.mrf.mxu0
        %v989 = vadd.f32 %v433, %v988
        %v990 = vpop.f32.mrf.mxu0
        %v991 = vadd.f32 %v437, %v990
        %992 = vmatprep.mubr.bf16.mxu0 %v553
        %993 = vmatmul.mubr.bf16.gmra.mxu0 %v552
        %v994 = vpop.f32.mrf.mxu0
        %v995 = vadd.f32 %v433, %v994
        %v996 = vpop.f32.mrf.mxu0
        %v997 = vadd.f32 %v437, %v996
        %v998 = vpop.f32.mrf.mxu0
        %v999 = vadd.f32 %v433, %v998
        %v1000 = vpop.f32.mrf.mxu0
        %v1001 = vadd.f32 %v437, %v1000
        %1002 = vmatprep.mubr.bf16.mxu0 %v555
        %1003 = vmatmul.mubr.bf16.gmra.mxu0 %v554
        %v1004 = vpop.f32.mrf.mxu0
        %v1005 = vadd.f32 %v433, %v1004
        %v1006 = vpop.f32.mrf.mxu0
        %v1007 = vadd.f32 %v437, %v1006
        %v1008 = vpop.f32.mrf.mxu0
        %v1009 = vadd.f32 %v433, %v1008
        %v1010 = vpop.f32.mrf.mxu0
        %v1011 = vadd.f32 %v437, %v1010
        %1012 = vmatprep.mubr.bf16.mxu0 %v557
        %1013 = vmatmul.mubr.bf16.gmra.mxu0 %v556
        %v1014 = vpop.f32.mrf.mxu0
        %v1015 = vadd.f32 %v433, %v1014
        %v1016 = vpop.f32.mrf.mxu0
        %v1017 = vadd.f32 %v437, %v1016
        %v1018 = vpop.f32.mrf.mxu0
        %v1019 = vadd.f32 %v433, %v1018
        %v1020 = vpop.f32.mrf.mxu0
        %v1021 = vadd.f32 %v437, %v1020
        %1022 = vmatprep.mubr.bf16.mxu0 %v559
        %1023 = vmatmul.mubr.bf16.gmra.mxu0 %v558
        %v1024 = vpop.f32.mrf.mxu0
        %v1025 = vadd.f32 %v433, %v1024
        %v1026 = vpop.f32.mrf.mxu0
        %v1027 = vadd.f32 %v437, %v1026
        %v1028 = vpop.f32.mrf.mxu0
        %v1029 = vadd.f32 %v433, %v1028
        %v1030 = vpop.f32.mrf.mxu0
        %v1031 = vadd.f32 %v437, %v1030
        %1032 = vmatprep.mubr.bf16.mxu0 %v561
        %1033 = vmatmul.mubr.bf16.gmra.mxu0 %v560
        %v1034 = vpop.f32.mrf.mxu0
        %v1035 = vadd.f32 %v433, %v1034
        %v1036 = vpop.f32.mrf.mxu0
        %v1037 = vadd.f32 %v437, %v1036
        %v1038 = vpop.f32.mrf.mxu0
        %v1039 = vadd.f32 %v433, %v1038
        %v1040 = vpop.f32.mrf.mxu0
        %v1041 = vadd.f32 %v437, %v1040
        %1042 = vmatprep.mubr.bf16.mxu0 %v563
        %1043 = vmatmul.mubr.bf16.gmra.mxu0 %v562
        %v1044 = vpop.f32.mrf.mxu0
        %v1045 = vadd.f32 %v433, %v1044
        %v1046 = vpop.f32.mrf.mxu0
        %v1047 = vadd.f32 %v437, %v1046
        %v1048 = vpop.f32.mrf.mxu0
        %v1049 = vadd.f32 %v433, %v1048
        %v1050 = vpop.f32.mrf.mxu0
        %v1051 = vadd.f32 %v437, %v1050
        %1052 = vmatprep.mubr.bf16.mxu0 %v565
        %1053 = vmatmul.mubr.bf16.gmra.mxu0 %v564
        %v1054 = vpop.f32.mrf.mxu0
        %v1055 = vadd.f32 %v433, %v1054
        %v1056 = vpop.f32.mrf.mxu0
        %v1057 = vadd.f32 %v437, %v1056
        %v1058 = vpop.f32.mrf.mxu0
        %v1059 = vadd.f32 %v433, %v1058
        %v1060 = vpop.f32.mrf.mxu0
        %v1061 = vadd.f32 %v437, %v1060
        %1062 = vmatprep.mubr.bf16.mxu0 %v567
        %1063 = vmatmul.mubr.bf16.gmra.mxu0 %v566
        %v1064 = vpop.f32.mrf.mxu0
        %v1065 = vadd.f32 %v433, %v1064
        %v1066 = vpop.f32.mrf.mxu0
        %v1067 = vadd.f32 %v437, %v1066
        %v1068 = vpop.f32.mrf.mxu0
        %v1069 = vadd.f32 %v433, %v1068
        %v1070 = vpop.f32.mrf.mxu0
        %v1071 = vadd.f32 %v437, %v1070
        %1072 = vmatprep.mubr.bf16.mxu0 %v569
        %1073 = vmatmul.mubr.bf16.gmra.mxu0 %v568
        %v1074 = vpop.f32.mrf.mxu0
        %v1075 = vadd.f32 %v433, %v1074
        %v1076 = vpop.f32.mrf.mxu0
        %v1077 = vadd.f32 %v437, %v1076
        %v1078 = vpop.f32.mrf.mxu0
        %v1079 = vadd.f32 %v433, %v1078
        %v1080 = vpop.f32.mrf.mxu0
        %v1081 = vadd.f32 %v437, %v1080
        %1082 = vmatprep.mubr.bf16.mxu0 %v571
        %1083 = vmatmul.mubr.bf16.gmra.mxu0 %v570
        %v1084 = vpop.f32.mrf.mxu0
        %v1085 = vadd.f32 %v433, %v1084
        %v1086 = vpop.f32.mrf.mxu0
        %v1087 = vadd.f32 %v437, %v1086
        %v1088 = vpop.f32.mrf.mxu0
        %v1089 = vadd.f32 %v433, %v1088
        %v1090 = vpop.f32.mrf.mxu0
        %v1091 = vadd.f32 %v437, %v1090
        %1092 = vmatprep.mubr.bf16.mxu0 %v573
        %1093 = vmatmul.mubr.bf16.gmra.mxu0 %v572
        %v1094 = vpop.f32.mrf.mxu0
        %v1095 = vadd.f32 %v433, %v1094
        %v1096 = vpop.f32.mrf.mxu0
        %v1097 = vadd.f32 %v437, %v1096
        %v1098 = vpop.f32.mrf.mxu0
        %v1099 = vadd.f32 %v433, %v1098
        %v1100 = vpop.f32.mrf.mxu0
        %v1101 = vadd.f32 %v437, %v1100
        %1102 = vmatprep.mubr.bf16.mxu0 %v575
        %1103 = vmatmul.mubr.bf16.gmra.mxu0 %v574
        %v1104 = vpop.f32.mrf.mxu0
        %v1105 = vadd.f32 %v433, %v1104
        %v1106 = vpop.f32.mrf.mxu0
        %v1107 = vadd.f32 %v437, %v1106
        %v1108 = vpop.f32.mrf.mxu0
        %v1109 = vadd.f32 %v433, %v1108
        %v1110 = vpop.f32.mrf.mxu0
        %v1111 = vadd.f32 %v437, %v1110
        %1112 = vmatprep.mubr.bf16.mxu0 %v577
        %1113 = vmatmul.mubr.bf16.gmra.mxu0 %v576
        %v1114 = vpop.f32.mrf.mxu0
        %v1115 = vadd.f32 %v433, %v1114
        %v1116 = vpop.f32.mrf.mxu0
        %v1117 = vadd.f32 %v437, %v1116
        %v1118 = vpop.f32.mrf.mxu0
        %v1119 = vadd.f32 %v433, %v1118
        %v1120 = vpop.f32.mrf.mxu0
        %v1121 = vadd.f32 %v437, %v1120
        %1122 = vdwg.mxu0
        %1123 = vmatprep.subr.bf16.mxu0 %v833
        %1124 = vmatpush1.bf16.msra.mxu0 %v832
        %1125 = vmatprep.subr.bf16.mxu0 %v829
        %1126 = vmatpush1.bf16.msra.mxu0 %v828
        %1127 = vmatprep.subr.bf16.mxu0 %v825
        %1128 = vmatpush1.bf16.msra.mxu0 %v824
        %1129 = vmatprep.subr.bf16.mxu0 %v821
        %1130 = vmatpush1.bf16.msra.mxu0 %v820
        %1131 = vmatprep.subr.bf16.mxu0 %v817
        %1132 = vmatpush1.bf16.msra.mxu0 %v816
        %1133 = vmatprep.subr.bf16.mxu0 %v813
        %1134 = vmatpush1.bf16.msra.mxu0 %v812
        %1135 = vmatprep.subr.bf16.mxu0 %v809
        %1136 = vmatpush1.bf16.msra.mxu0 %v808
        %1137 = vmatprep.subr.bf16.mxu0 %v805
        %1138 = vmatpush1.bf16.msra.mxu0 %v804
        %1139 = vmatprep.subr.bf16.mxu0 %v865
        %1140 = vmatpush2.bf16.msra.mxu0 %v864
        %1141 = vmatprep.subr.bf16.mxu0 %v861
        %1142 = vmatpush2.bf16.msra.mxu0 %v860
        %1143 = vmatprep.subr.bf16.mxu0 %v857
        %1144 = vmatpush2.bf16.msra.mxu0 %v856
        %1145 = vmatprep.subr.bf16.mxu0 %v853
        %1146 = vmatpush2.bf16.msra.mxu0 %v852
        %1147 = vmatprep.subr.bf16.mxu0 %v849
        %1148 = vmatpush2.bf16.msra.mxu0 %v848
        %1149 = vmatprep.subr.bf16.mxu0 %v845
        %1150 = vmatpush2.bf16.msra.mxu0 %v844
        %1151 = vmatprep.subr.bf16.mxu0 %v841
        %1152 = vmatpush2.bf16.msra.mxu0 %v840
        %1153 = vmatprep.subr.bf16.mxu0 %v837
        %1154 = vmatpush2.bf16.msra.mxu0 %v836
        %1155 = vmatprep.mubr.bf16.mxu0 %v547
        %1156 = vmatmul.mubr.bf16.gmra.mxu0 %v546
        %v1157 = vpop.f32.mrf.mxu0
        %v1158 = vadd.f32 %v441, %v1157
        %v1159 = vpop.f32.mrf.mxu0
        %v1160 = vadd.f32 %v445, %v1159
        %v1161 = vpop.f32.mrf.mxu0
        %v1162 = vadd.f32 %v441, %v1161
        %v1163 = vpop.f32.mrf.mxu0
        %v1164 = vadd.f32 %v445, %v1163
        %1165 = vmatprep.mubr.bf16.mxu0 %v549
        %1166 = vmatmul.mubr.bf16.gmra.mxu0 %v548
        %v1167 = vpop.f32.mrf.mxu0
        %v1168 = vadd.f32 %v441, %v1167
        %v1169 = vpop.f32.mrf.mxu0
        %v1170 = vadd.f32 %v445, %v1169
        %v1171 = vpop.f32.mrf.mxu0
        %v1172 = vadd.f32 %v441, %v1171
        %v1173 = vpop.f32.mrf.mxu0
        %v1174 = vadd.f32 %v445, %v1173
        %1175 = vmatprep.mubr.bf16.mxu0 %v551
        %1176 = vmatmul.mubr.bf16.gmra.mxu0 %v550
        %v1177 = vpop.f32.mrf.mxu0
        %v1178 = vadd.f32 %v441, %v1177
        %v1179 = vpop.f32.mrf.mxu0
        %v1180 = vadd.f32 %v445, %v1179
        %v1181 = vpop.f32.mrf.mxu0
        %v1182 = vadd.f32 %v441, %v1181
        %v1183 = vpop.f32.mrf.mxu0
        %v1184 = vadd.f32 %v445, %v1183
        %1185 = vmatprep.mubr.bf16.mxu0 %v553
        %1186 = vmatmul.mubr.bf16.gmra.mxu0 %v552
        %v1187 = vpop.f32.mrf.mxu0
        %v1188 = vadd.f32 %v441, %v1187
        %v1189 = vpop.f32.mrf.mxu0
        %v1190 = vadd.f32 %v445, %v1189
        %v1191 = vpop.f32.mrf.mxu0
        %v1192 = vadd.f32 %v441, %v1191
        %v1193 = vpop.f32.mrf.mxu0
        %v1194 = vadd.f32 %v445, %v1193
        %1195 = vmatprep.mubr.bf16.mxu0 %v555
        %1196 = vmatmul.mubr.bf16.gmra.mxu0 %v554
        %v1197 = vpop.f32.mrf.mxu0
        %v1198 = vadd.f32 %v441, %v1197
        %v1199 = vpop.f32.mrf.mxu0
        %v1200 = vadd.f32 %v445, %v1199
        %v1201 = vpop.f32.mrf.mxu0
        %v1202 = vadd.f32 %v441, %v1201
        %v1203 = vpop.f32.mrf.mxu0
        %v1204 = vadd.f32 %v445, %v1203
        %1205 = vmatprep.mubr.bf16.mxu0 %v557
        %1206 = vmatmul.mubr.bf16.gmra.mxu0 %v556
        %v1207 = vpop.f32.mrf.mxu0
        %v1208 = vadd.f32 %v441, %v1207
        %v1209 = vpop.f32.mrf.mxu0
        %v1210 = vadd.f32 %v445, %v1209
        %v1211 = vpop.f32.mrf.mxu0
        %v1212 = vadd.f32 %v441, %v1211
        %v1213 = vpop.f32.mrf.mxu0
        %v1214 = vadd.f32 %v445, %v1213
        %1215 = vmatprep.mubr.bf16.mxu0 %v559
        %1216 = vmatmul.mubr.bf16.gmra.mxu0 %v558
        %v1217 = vpop.f32.mrf.mxu0
        %v1218 = vadd.f32 %v441, %v1217
        %v1219 = vpop.f32.mrf.mxu0
        %v1220 = vadd.f32 %v445, %v1219
        %v1221 = vpop.f32.mrf.mxu0
        %v1222 = vadd.f32 %v441, %v1221
        %v1223 = vpop.f32.mrf.mxu0
        %v1224 = vadd.f32 %v445, %v1223
        %1225 = vmatprep.mubr.bf16.mxu0 %v561
        %1226 = vmatmul.mubr.bf16.gmra.mxu0 %v560
        %v1227 = vpop.f32.mrf.mxu0
        %v1228 = vadd.f32 %v441, %v1227
        %v1229 = vpop.f32.mrf.mxu0
        %v1230 = vadd.f32 %v445, %v1229
        %v1231 = vpop.f32.mrf.mxu0
        %v1232 = vadd.f32 %v441, %v1231
        %v1233 = vpop.f32.mrf.mxu0
        %v1234 = vadd.f32 %v445, %v1233
        %1235 = vmatprep.mubr.bf16.mxu0 %v563
        %1236 = vmatmul.mubr.bf16.gmra.mxu0 %v562
        %v1237 = vpop.f32.mrf.mxu0
        %v1238 = vadd.f32 %v441, %v1237
        %v1239 = vpop.f32.mrf.mxu0
        %v1240 = vadd.f32 %v445, %v1239
        %v1241 = vpop.f32.mrf.mxu0
        %v1242 = vadd.f32 %v441, %v1241
        %v1243 = vpop.f32.mrf.mxu0
        %v1244 = vadd.f32 %v445, %v1243
        %1245 = vmatprep.mubr.bf16.mxu0 %v565
        %1246 = vmatmul.mubr.bf16.gmra.mxu0 %v564
        %v1247 = vpop.f32.mrf.mxu0
        %v1248 = vadd.f32 %v441, %v1247
        %v1249 = vpop.f32.mrf.mxu0
        %v1250 = vadd.f32 %v445, %v1249
        %v1251 = vpop.f32.mrf.mxu0
        %v1252 = vadd.f32 %v441, %v1251
        %v1253 = vpop.f32.mrf.mxu0
        %v1254 = vadd.f32 %v445, %v1253
        %1255 = vmatprep.mubr.bf16.mxu0 %v567
        %1256 = vmatmul.mubr.bf16.gmra.mxu0 %v566
        %v1257 = vpop.f32.mrf.mxu0
        %v1258 = vadd.f32 %v441, %v1257
        %v1259 = vpop.f32.mrf.mxu0
        %v1260 = vadd.f32 %v445, %v1259
        %v1261 = vpop.f32.mrf.mxu0
        %v1262 = vadd.f32 %v441, %v1261
        %v1263 = vpop.f32.mrf.mxu0
        %v1264 = vadd.f32 %v445, %v1263
        %1265 = vmatprep.mubr.bf16.mxu0 %v569
        %1266 = vmatmul.mubr.bf16.gmra.mxu0 %v568
        %v1267 = vpop.f32.mrf.mxu0
        %v1268 = vadd.f32 %v441, %v1267
        %v1269 = vpop.f32.mrf.mxu0
        %v1270 = vadd.f32 %v445, %v1269
        %v1271 = vpop.f32.mrf.mxu0
        %v1272 = vadd.f32 %v441, %v1271
        %v1273 = vpop.f32.mrf.mxu0
        %v1274 = vadd.f32 %v445, %v1273
        %1275 = vmatprep.mubr.bf16.mxu0 %v571
        %1276 = vmatmul.mubr.bf16.gmra.mxu0 %v570
        %v1277 = vpop.f32.mrf.mxu0
        %v1278 = vadd.f32 %v441, %v1277
        %v1279 = vpop.f32.mrf.mxu0
        %v1280 = vadd.f32 %v445, %v1279
        %v1281 = vpop.f32.mrf.mxu0
        %v1282 = vadd.f32 %v441, %v1281
        %v1283 = vpop.f32.mrf.mxu0
        %v1284 = vadd.f32 %v445, %v1283
        %1285 = vmatprep.mubr.bf16.mxu0 %v573
        %1286 = vmatmul.mubr.bf16.gmra.mxu0 %v572
        %v1287 = vpop.f32.mrf.mxu0
        %v1288 = vadd.f32 %v441, %v1287
        %v1289 = vpop.f32.mrf.mxu0
        %v1290 = vadd.f32 %v445, %v1289
        %v1291 = vpop.f32.mrf.mxu0
        %v1292 = vadd.f32 %v441, %v1291
        %v1293 = vpop.f32.mrf.mxu0
        %v1294 = vadd.f32 %v445, %v1293
        %1295 = vmatprep.mubr.bf16.mxu0 %v575
        %1296 = vmatmul.mubr.bf16.gmra.mxu0 %v574
        %v1297 = vpop.f32.mrf.mxu0
        %v1298 = vadd.f32 %v441, %v1297
        %v1299 = vpop.f32.mrf.mxu0
        %v1300 = vadd.f32 %v445, %v1299
        %v1301 = vpop.f32.mrf.mxu0
        %v1302 = vadd.f32 %v441, %v1301
        %v1303 = vpop.f32.mrf.mxu0
        %v1304 = vadd.f32 %v445, %v1303
        %1305 = vmatprep.mubr.bf16.mxu0 %v577
        %1306 = vmatmul.mubr.bf16.gmra.mxu0 %v576
        %v1307 = vpop.f32.mrf.mxu0
        %v1308 = vadd.f32 %v441, %v1307
        %v1309 = vpop.f32.mrf.mxu0
        %v1310 = vadd.f32 %v445, %v1309
        %v1311 = vpop.f32.mrf.mxu0
        %v1312 = vadd.f32 %v441, %v1311
        %v1313 = vpop.f32.mrf.mxu0
        %v1314 = vadd.f32 %v445, %v1313
        %1315 = vdwg.mxu0
        %vm1316 = vcmp.gt.f32.partialorder %v965, 0.0
        %vm1317 = vcmp.gt.f32.partialorder %v967, 0.0
        %vm1318 = vcmp.gt.f32.partialorder %v1158, 0.0
        %vm1319 = vcmp.gt.f32.partialorder %v1160, 0.0
        %vm1320 = vcmp.gt.f32.partialorder %v969, 0.0
        %vm1321 = vcmp.gt.f32.partialorder %v971, 0.0
        %vm1322 = vcmp.gt.f32.partialorder %v1162, 0.0
        %vm1323 = vcmp.gt.f32.partialorder %v1164, 0.0
        %vm1324 = vcmp.gt.f32.partialorder %v975, 0.0
        %vm1325 = vcmp.gt.f32.partialorder %v977, 0.0
        %vm1326 = vcmp.gt.f32.partialorder %v1168, 0.0
        %vm1327 = vcmp.gt.f32.partialorder %v1170, 0.0
        %vm1328 = vcmp.gt.f32.partialorder %v979, 0.0
        %vm1329 = vcmp.gt.f32.partialorder %v981, 0.0
        %vm1330 = vcmp.gt.f32.partialorder %v1172, 0.0
        %vm1331 = vcmp.gt.f32.partialorder %v1174, 0.0
        %vm1332 = vcmp.gt.f32.partialorder %v985, 0.0
        %vm1333 = vcmp.gt.f32.partialorder %v987, 0.0
        %vm1334 = vcmp.gt.f32.partialorder %v1178, 0.0
        %vm1335 = vcmp.gt.f32.partialorder %v1180, 0.0
        %vm1336 = vcmp.gt.f32.partialorder %v989, 0.0
        %vm1337 = vcmp.gt.f32.partialorder %v991, 0.0
        %vm1338 = vcmp.gt.f32.partialorder %v1182, 0.0
        %vm1339 = vcmp.gt.f32.partialorder %v1184, 0.0
        %vm1340 = vcmp.gt.f32.partialorder %v995, 0.0
        %vm1341 = vcmp.gt.f32.partialorder %v997, 0.0
        %vm1342 = vcmp.gt.f32.partialorder %v1188, 0.0
        %vm1343 = vcmp.gt.f32.partialorder %v1190, 0.0
        %vm1344 = vcmp.gt.f32.partialorder %v999, 0.0
        %vm1345 = vcmp.gt.f32.partialorder %v1001, 0.0
        %vm1346 = vcmp.gt.f32.partialorder %v1192, 0.0
        %vm1347 = vcmp.gt.f32.partialorder %v1194, 0.0
        %vm1348 = vcmp.gt.f32.partialorder %v1005, 0.0
        %vm1349 = vcmp.gt.f32.partialorder %v1007, 0.0
        %vm1350 = vcmp.gt.f32.partialorder %v1198, 0.0
        %vm1351 = vcmp.gt.f32.partialorder %v1200, 0.0
        %vm1352 = vcmp.gt.f32.partialorder %v1009, 0.0
        %vm1353 = vcmp.gt.f32.partialorder %v1011, 0.0
        %vm1354 = vcmp.gt.f32.partialorder %v1202, 0.0
        %vm1355 = vcmp.gt.f32.partialorder %v1204, 0.0
        %vm1356 = vcmp.gt.f32.partialorder %v1015, 0.0
        %vm1357 = vcmp.gt.f32.partialorder %v1017, 0.0
        %vm1358 = vcmp.gt.f32.partialorder %v1208, 0.0
        %vm1359 = vcmp.gt.f32.partialorder %v1210, 0.0
        %vm1360 = vcmp.gt.f32.partialorder %v1019, 0.0
        %vm1361 = vcmp.gt.f32.partialorder %v1021, 0.0
        %vm1362 = vcmp.gt.f32.partialorder %v1212, 0.0
        %vm1363 = vcmp.gt.f32.partialorder %v1214, 0.0
        %vm1364 = vcmp.gt.f32.partialorder %v1025, 0.0
        %vm1365 = vcmp.gt.f32.partialorder %v1027, 0.0
        %vm1366 = vcmp.gt.f32.partialorder %v1218, 0.0
        %vm1367 = vcmp.gt.f32.partialorder %v1220, 0.0
        %vm1368 = vcmp.gt.f32.partialorder %v1029, 0.0
        %vm1369 = vcmp.gt.f32.partialorder %v1031, 0.0
        %vm1370 = vcmp.gt.f32.partialorder %v1222, 0.0
        %vm1371 = vcmp.gt.f32.partialorder %v1224, 0.0
        %vm1372 = vcmp.gt.f32.partialorder %v1035, 0.0
        %vm1373 = vcmp.gt.f32.partialorder %v1037, 0.0
        %vm1374 = vcmp.gt.f32.partialorder %v1228, 0.0
        %vm1375 = vcmp.gt.f32.partialorder %v1230, 0.0
        %vm1376 = vcmp.gt.f32.partialorder %v1039, 0.0
        %vm1377 = vcmp.gt.f32.partialorder %v1041, 0.0
        %vm1378 = vcmp.gt.f32.partialorder %v1232, 0.0
        %vm1379 = vcmp.gt.f32.partialorder %v1234, 0.0
        %vm1380 = vcmp.gt.f32.partialorder %v1045, 0.0
        %vm1381 = vcmp.gt.f32.partialorder %v1047, 0.0
        %vm1382 = vcmp.gt.f32.partialorder %v1238, 0.0
        %vm1383 = vcmp.gt.f32.partialorder %v1240, 0.0
        %vm1384 = vcmp.gt.f32.partialorder %v1049, 0.0
        %vm1385 = vcmp.gt.f32.partialorder %v1051, 0.0
        %vm1386 = vcmp.gt.f32.partialorder %v1242, 0.0
        %vm1387 = vcmp.gt.f32.partialorder %v1244, 0.0
        %vm1388 = vcmp.gt.f32.partialorder %v1055, 0.0
        %vm1389 = vcmp.gt.f32.partialorder %v1057, 0.0
        %vm1390 = vcmp.gt.f32.partialorder %v1248, 0.0
        %vm1391 = vcmp.gt.f32.partialorder %v1250, 0.0
        %vm1392 = vcmp.gt.f32.partialorder %v1059, 0.0
        %vm1393 = vcmp.gt.f32.partialorder %v1061, 0.0
        %vm1394 = vcmp.gt.f32.partialorder %v1252, 0.0
        %vm1395 = vcmp.gt.f32.partialorder %v1254, 0.0
        %vm1396 = vcmp.gt.f32.partialorder %v1065, 0.0
        %vm1397 = vcmp.gt.f32.partialorder %v1067, 0.0
        %vm1398 = vcmp.gt.f32.partialorder %v1258, 0.0
        %vm1399 = vcmp.gt.f32.partialorder %v1260, 0.0
        %vm1400 = vcmp.gt.f32.partialorder %v1069, 0.0
        %vm1401 = vcmp.gt.f32.partialorder %v1071, 0.0
        %vm1402 = vcmp.gt.f32.partialorder %v1262, 0.0
        %vm1403 = vcmp.gt.f32.partialorder %v1264, 0.0
        %vm1404 = vcmp.gt.f32.partialorder %v1075, 0.0
        %vm1405 = vcmp.gt.f32.partialorder %v1077, 0.0
        %vm1406 = vcmp.gt.f32.partialorder %v1268, 0.0
        %vm1407 = vcmp.gt.f32.partialorder %v1270, 0.0
        %vm1408 = vcmp.gt.f32.partialorder %v1079, 0.0
        %vm1409 = vcmp.gt.f32.partialorder %v1081, 0.0
        %vm1410 = vcmp.gt.f32.partialorder %v1272, 0.0
        %vm1411 = vcmp.gt.f32.partialorder %v1274, 0.0
        %vm1412 = vcmp.gt.f32.partialorder %v1085, 0.0
        %vm1413 = vcmp.gt.f32.partialorder %v1087, 0.0
        %vm1414 = vcmp.gt.f32.partialorder %v1278, 0.0
        %vm1415 = vcmp.gt.f32.partialorder %v1280, 0.0
        %vm1416 = vcmp.gt.f32.partialorder %v1089, 0.0
        %vm1417 = vcmp.gt.f32.partialorder %v1091, 0.0
        %vm1418 = vcmp.gt.f32.partialorder %v1282, 0.0
        %vm1419 = vcmp.gt.f32.partialorder %v1284, 0.0
        %vm1420 = vcmp.gt.f32.partialorder %v1095, 0.0
        %vm1421 = vcmp.gt.f32.partialorder %v1097, 0.0
        %vm1422 = vcmp.gt.f32.partialorder %v1288, 0.0
        %vm1423 = vcmp.gt.f32.partialorder %v1290, 0.0
        %vm1424 = vcmp.gt.f32.partialorder %v1099, 0.0
        %vm1425 = vcmp.gt.f32.partialorder %v1101, 0.0
        %vm1426 = vcmp.gt.f32.partialorder %v1292, 0.0
        %vm1427 = vcmp.gt.f32.partialorder %v1294, 0.0
        %vm1428 = vcmp.gt.f32.partialorder %v1105, 0.0
        %vm1429 = vcmp.gt.f32.partialorder %v1107, 0.0
        %vm1430 = vcmp.gt.f32.partialorder %v1298, 0.0
        %vm1431 = vcmp.gt.f32.partialorder %v1300, 0.0
        %vm1432 = vcmp.gt.f32.partialorder %v1109, 0.0
        %vm1433 = vcmp.gt.f32.partialorder %v1111, 0.0
        %vm1434 = vcmp.gt.f32.partialorder %v1302, 0.0
        %vm1435 = vcmp.gt.f32.partialorder %v1304, 0.0
        %vm1436 = vcmp.gt.f32.partialorder %v1115, 0.0
        %vm1437 = vcmp.gt.f32.partialorder %v1117, 0.0
        %vm1438 = vcmp.gt.f32.partialorder %v1308, 0.0
        %vm1439 = vcmp.gt.f32.partialorder %v1310, 0.0
        %vm1440 = vcmp.gt.f32.partialorder %v1119, 0.0
        %vm1441 = vcmp.gt.f32.partialorder %v1121, 0.0
        %vm1442 = vcmp.gt.f32.partialorder %v1312, 0.0
        %vm1443 = vcmp.gt.f32.partialorder %v1314, 0.0
        %v1444 = vmul.f32 %v965, 0.2
        %v1445 = vmul.f32 %v967, 0.2
        %v1446 = vmul.f32 %v1158, 0.2
        %v1447 = vmul.f32 %v1160, 0.2
        %v1448 = vmul.f32 %v969, 0.2
        %v1449 = vmul.f32 %v971, 0.2
        %v1450 = vmul.f32 %v1162, 0.2
        %v1451 = vmul.f32 %v1164, 0.2
        %v1452 = vmul.f32 %v975, 0.2
        %v1453 = vmul.f32 %v977, 0.2
        %v1454 = vmul.f32 %v1168, 0.2
        %v1455 = vmul.f32 %v1170, 0.2
        %v1456 = vmul.f32 %v979, 0.2
        %v1457 = vmul.f32 %v981, 0.2
        %v1458 = vmul.f32 %v1172, 0.2
        %v1459 = vmul.f32 %v1174, 0.2
        %v1460 = vmul.f32 %v985, 0.2
        %v1461 = vmul.f32 %v987, 0.2
        %v1462 = vmul.f32 %v1178, 0.2
        %v1463 = vmul.f32 %v1180, 0.2
        %v1464 = vmul.f32 %v989, 0.2
        %v1465 = vmul.f32 %v991, 0.2
        %v1466 = vmul.f32 %v1182, 0.2
        %v1467 = vmul.f32 %v1184, 0.2
        %v1468 = vmul.f32 %v995, 0.2
        %v1469 = vmul.f32 %v997, 0.2
        %v1470 = vmul.f32 %v1188, 0.2
        %v1471 = vmul.f32 %v1190, 0.2
        %v1472 = vmul.f32 %v999, 0.2
        %v1473 = vmul.f32 %v1001, 0.2
        %v1474 = vmul.f32 %v1192, 0.2
        %v1475 = vmul.f32 %v1194, 0.2
        %v1476 = vmul.f32 %v1005, 0.2
        %v1477 = vmul.f32 %v1007, 0.2
        %v1478 = vmul.f32 %v1198, 0.2
        %v1479 = vmul.f32 %v1200, 0.2
        %v1480 = vmul.f32 %v1009, 0.2
        %v1481 = vmul.f32 %v1011, 0.2
        %v1482 = vmul.f32 %v1202, 0.2
        %v1483 = vmul.f32 %v1204, 0.2
        %v1484 = vmul.f32 %v1015, 0.2
        %v1485 = vmul.f32 %v1017, 0.2
        %v1486 = vmul.f32 %v1208, 0.2
        %v1487 = vmul.f32 %v1210, 0.2
        %v1488 = vmul.f32 %v1019, 0.2
        %v1489 = vmul.f32 %v1021, 0.2
        %v1490 = vmul.f32 %v1212, 0.2
        %v1491 = vmul.f32 %v1214, 0.2
        %v1492 = vmul.f32 %v1025, 0.2
        %v1493 = vmul.f32 %v1027, 0.2
        %v1494 = vmul.f32 %v1218, 0.2
        %v1495 = vmul.f32 %v1220, 0.2
        %v1496 = vmul.f32 %v1029, 0.2
        %v1497 = vmul.f32 %v1031, 0.2
        %v1498 = vmul.f32 %v1222, 0.2
        %v1499 = vmul.f32 %v1224, 0.2
        %v1500 = vmul.f32 %v1035, 0.2
        %v1501 = vmul.f32 %v1037, 0.2
        %v1502 = vmul.f32 %v1228, 0.2
        %v1503 = vmul.f32 %v1230, 0.2
        %v1504 = vmul.f32 %v1039, 0.2
        %v1505 = vmul.f32 %v1041, 0.2
        %v1506 = vmul.f32 %v1232, 0.2
        %v1507 = vmul.f32 %v1234, 0.2
        %v1508 = vmul.f32 %v1045, 0.2
        %v1509 = vmul.f32 %v1047, 0.2
        %v1510 = vmul.f32 %v1238, 0.2
        %v1511 = vmul.f32 %v1240, 0.2
        %v1512 = vmul.f32 %v1049, 0.2
        %v1513 = vmul.f32 %v1051, 0.2
        %v1514 = vmul.f32 %v1242, 0.2
        %v1515 = vmul.f32 %v1244, 0.2
        %v1516 = vmul.f32 %v1055, 0.2
        %v1517 = vmul.f32 %v1057, 0.2
        %v1518 = vmul.f32 %v1248, 0.2
        %v1519 = vmul.f32 %v1250, 0.2
        %v1520 = vmul.f32 %v1059, 0.2
        %v1521 = vmul.f32 %v1061, 0.2
        %v1522 = vmul.f32 %v1252, 0.2
        %v1523 = vmul.f32 %v1254, 0.2
        %v1524 = vmul.f32 %v1065, 0.2
        %v1525 = vmul.f32 %v1067, 0.2
        %v1526 = vmul.f32 %v1258, 0.2
        %v1527 = vmul.f32 %v1260, 0.2
        %v1528 = vmul.f32 %v1069, 0.2
        %v1529 = vmul.f32 %v1071, 0.2
        %v1530 = vmul.f32 %v1262, 0.2
        %v1531 = vmul.f32 %v1264, 0.2
        %v1532 = vmul.f32 %v1075, 0.2
        %v1533 = vmul.f32 %v1077, 0.2
        %v1534 = vmul.f32 %v1268, 0.2
        %v1535 = vmul.f32 %v1270, 0.2
        %v1536 = vmul.f32 %v1079, 0.2
        %v1537 = vmul.f32 %v1081, 0.2
        %v1538 = vmul.f32 %v1272, 0.2
        %v1539 = vmul.f32 %v1274, 0.2
        %v1540 = vmul.f32 %v1085, 0.2
        %v1541 = vmul.f32 %v1087, 0.2
        %v1542 = vmul.f32 %v1278, 0.2
        %v1543 = vmul.f32 %v1280, 0.2
        %v1544 = vmul.f32 %v1089, 0.2
        %v1545 = vmul.f32 %v1091, 0.2
        %v1546 = vmul.f32 %v1282, 0.2
        %v1547 = vmul.f32 %v1284, 0.2
        %v1548 = vmul.f32 %v1095, 0.2
        %v1549 = vmul.f32 %v1097, 0.2
        %v1550 = vmul.f32 %v1288, 0.2
        %v1551 = vmul.f32 %v1290, 0.2
        %v1552 = vmul.f32 %v1099, 0.2
        %v1553 = vmul.f32 %v1101, 0.2
        %v1554 = vmul.f32 %v1292, 0.2
        %v1555 = vmul.f32 %v1294, 0.2
        %v1556 = vmul.f32 %v1105, 0.2
        %v1557 = vmul.f32 %v1107, 0.2
        %v1558 = vmul.f32 %v1298, 0.2
        %v1559 = vmul.f32 %v1300, 0.2
        %v1560 = vmul.f32 %v1109, 0.2
        %v1561 = vmul.f32 %v1111, 0.2
        %v1562 = vmul.f32 %v1302, 0.2
        %v1563 = vmul.f32 %v1304, 0.2
        %v1564 = vmul.f32 %v1115, 0.2
        %v1565 = vmul.f32 %v1117, 0.2
        %v1566 = vmul.f32 %v1308, 0.2
        %v1567 = vmul.f32 %v1310, 0.2
        %v1568 = vmul.f32 %v1119, 0.2
        %v1569 = vmul.f32 %v1121, 0.2
        %v1570 = vmul.f32 %v1312, 0.2
        %v1571 = vmul.f32 %v1314, 0.2
        %v1572 = vsel %vm1316, %v965, %v1444
        %v1573 = vsel %vm1317, %v967, %v1445
        %v1574 = vsel %vm1318, %v1158, %v1446
        %v1575 = vsel %vm1319, %v1160, %v1447
        %v1576 = vsel %vm1320, %v969, %v1448
        %v1577 = vsel %vm1321, %v971, %v1449
        %v1578 = vsel %vm1322, %v1162, %v1450
        %v1579 = vsel %vm1323, %v1164, %v1451
        %v1580 = vsel %vm1324, %v975, %v1452
        %v1581 = vsel %vm1325, %v977, %v1453
        %v1582 = vsel %vm1326, %v1168, %v1454
        %v1583 = vsel %vm1327, %v1170, %v1455
        %v1584 = vsel %vm1328, %v979, %v1456
        %v1585 = vsel %vm1329, %v981, %v1457
        %v1586 = vsel %vm1330, %v1172, %v1458
        %v1587 = vsel %vm1331, %v1174, %v1459
        %v1588 = vsel %vm1332, %v985, %v1460
        %v1589 = vsel %vm1333, %v987, %v1461
        %v1590 = vsel %vm1334, %v1178, %v1462
        %v1591 = vsel %vm1335, %v1180, %v1463
        %v1592 = vsel %vm1336, %v989, %v1464
        %v1593 = vsel %vm1337, %v991, %v1465
        %v1594 = vsel %vm1338, %v1182, %v1466
        %v1595 = vsel %vm1339, %v1184, %v1467
        %v1596 = vsel %vm1340, %v995, %v1468
        %v1597 = vsel %vm1341, %v997, %v1469
        %v1598 = vsel %vm1342, %v1188, %v1470
        %v1599 = vsel %vm1343, %v1190, %v1471
        %v1600 = vsel %vm1344, %v999, %v1472
        %v1601 = vsel %vm1345, %v1001, %v1473
        %v1602 = vsel %vm1346, %v1192, %v1474
        %v1603 = vsel %vm1347, %v1194, %v1475
        %v1604 = vsel %vm1348, %v1005, %v1476
        %v1605 = vsel %vm1349, %v1007, %v1477
        %v1606 = vsel %vm1350, %v1198, %v1478
        %v1607 = vsel %vm1351, %v1200, %v1479
        %v1608 = vsel %vm1352, %v1009, %v1480
        %v1609 = vsel %vm1353, %v1011, %v1481
        %v1610 = vsel %vm1354, %v1202, %v1482
        %v1611 = vsel %vm1355, %v1204, %v1483
        %v1612 = vsel %vm1356, %v1015, %v1484
        %v1613 = vsel %vm1357, %v1017, %v1485
        %v1614 = vsel %vm1358, %v1208, %v1486
        %v1615 = vsel %vm1359, %v1210, %v1487
        %v1616 = vsel %vm1360, %v1019, %v1488
        %v1617 = vsel %vm1361, %v1021, %v1489
        %v1618 = vsel %vm1362, %v1212, %v1490
        %v1619 = vsel %vm1363, %v1214, %v1491
        %v1620 = vsel %vm1364, %v1025, %v1492
        %v1621 = vsel %vm1365, %v1027, %v1493
        %v1622 = vsel %vm1366, %v1218, %v1494
        %v1623 = vsel %vm1367, %v1220, %v1495
        %v1624 = vsel %vm1368, %v1029, %v1496
        %v1625 = vsel %vm1369, %v1031, %v1497
        %v1626 = vsel %vm1370, %v1222, %v1498
        %v1627 = vsel %vm1371, %v1224, %v1499
        %v1628 = vsel %vm1372, %v1035, %v1500
        %v1629 = vsel %vm1373, %v1037, %v1501
        %v1630 = vsel %vm1374, %v1228, %v1502
        %v1631 = vsel %vm1375, %v1230, %v1503
        %v1632 = vsel %vm1376, %v1039, %v1504
        %v1633 = vsel %vm1377, %v1041, %v1505
        %v1634 = vsel %vm1378, %v1232, %v1506
        %v1635 = vsel %vm1379, %v1234, %v1507
        %v1636 = vsel %vm1380, %v1045, %v1508
        %v1637 = vsel %vm1381, %v1047, %v1509
        %v1638 = vsel %vm1382, %v1238, %v1510
        %v1639 = vsel %vm1383, %v1240, %v1511
        %v1640 = vsel %vm1384, %v1049, %v1512
        %v1641 = vsel %vm1385, %v1051, %v1513
        %v1642 = vsel %vm1386, %v1242, %v1514
        %v1643 = vsel %vm1387, %v1244, %v1515
        %v1644 = vsel %vm1388, %v1055, %v1516
        %v1645 = vsel %vm1389, %v1057, %v1517
        %v1646 = vsel %vm1390, %v1248, %v1518
        %v1647 = vsel %vm1391, %v1250, %v1519
        %v1648 = vsel %vm1392, %v1059, %v1520
        %v1649 = vsel %vm1393, %v1061, %v1521
        %v1650 = vsel %vm1394, %v1252, %v1522
        %v1651 = vsel %vm1395, %v1254, %v1523
        %v1652 = vsel %vm1396, %v1065, %v1524
        %v1653 = vsel %vm1397, %v1067, %v1525
        %v1654 = vsel %vm1398, %v1258, %v1526
        %v1655 = vsel %vm1399, %v1260, %v1527
        %v1656 = vsel %vm1400, %v1069, %v1528
        %v1657 = vsel %vm1401, %v1071, %v1529
        %v1658 = vsel %vm1402, %v1262, %v1530
        %v1659 = vsel %vm1403, %v1264, %v1531
        %v1660 = vsel %vm1404, %v1075, %v1532
        %v1661 = vsel %vm1405, %v1077, %v1533
        %v1662 = vsel %vm1406, %v1268, %v1534
        %v1663 = vsel %vm1407, %v1270, %v1535
        %v1664 = vsel %vm1408, %v1079, %v1536
        %v1665 = vsel %vm1409, %v1081, %v1537
        %v1666 = vsel %vm1410, %v1272, %v1538
        %v1667 = vsel %vm1411, %v1274, %v1539
        %v1668 = vsel %vm1412, %v1085, %v1540
        %v1669 = vsel %vm1413, %v1087, %v1541
        %v1670 = vsel %vm1414, %v1278, %v1542
        %v1671 = vsel %vm1415, %v1280, %v1543
        %v1672 = vsel %vm1416, %v1089, %v1544
        %v1673 = vsel %vm1417, %v1091, %v1545
        %v1674 = vsel %vm1418, %v1282, %v1546
        %v1675 = vsel %vm1419, %v1284, %v1547
        %v1676 = vsel %vm1420, %v1095, %v1548
        %v1677 = vsel %vm1421, %v1097, %v1549
        %v1678 = vsel %vm1422, %v1288, %v1550
        %v1679 = vsel %vm1423, %v1290, %v1551
        %v1680 = vsel %vm1424, %v1099, %v1552
        %v1681 = vsel %vm1425, %v1101, %v1553
        %v1682 = vsel %vm1426, %v1292, %v1554
        %v1683 = vsel %vm1427, %v1294, %v1555
        %v1684 = vsel %vm1428, %v1105, %v1556
        %v1685 = vsel %vm1429, %v1107, %v1557
        %v1686 = vsel %vm1430, %v1298, %v1558
        %v1687 = vsel %vm1431, %v1300, %v1559
        %v1688 = vsel %vm1432, %v1109, %v1560
        %v1689 = vsel %vm1433, %v1111, %v1561
        %v1690 = vsel %vm1434, %v1302, %v1562
        %v1691 = vsel %vm1435, %v1304, %v1563
        %v1692 = vsel %vm1436, %v1115, %v1564
        %v1693 = vsel %vm1437, %v1117, %v1565
        %v1694 = vsel %vm1438, %v1308, %v1566
        %v1695 = vsel %vm1439, %v1310, %v1567
        %v1696 = vsel %vm1440, %v1119, %v1568
        %v1697 = vsel %vm1441, %v1121, %v1569
        %v1698 = vsel %vm1442, %v1312, %v1570
        %v1699 = vsel %vm1443, %v1314, %v1571
        %v1700 = vpack.c.bf16 %v1576, %v1572
        %v1701 = vpack.c.bf16 %v1577, %v1573
        %v1702 = vpack.c.bf16 %v1578, %v1574
        %v1703 = vpack.c.bf16 %v1579, %v1575
        %v1704 = vpack.c.bf16 %v1584, %v1580
        %v1705 = vpack.c.bf16 %v1585, %v1581
        %v1706 = vpack.c.bf16 %v1586, %v1582
        %v1707 = vpack.c.bf16 %v1587, %v1583
        %v1708 = vpack.c.bf16 %v1592, %v1588
        %v1709 = vpack.c.bf16 %v1593, %v1589
        %v1710 = vpack.c.bf16 %v1594, %v1590
        %v1711 = vpack.c.bf16 %v1595, %v1591
        %v1712 = vpack.c.bf16 %v1600, %v1596
        %v1713 = vpack.c.bf16 %v1601, %v1597
        %v1714 = vpack.c.bf16 %v1602, %v1598
        %v1715 = vpack.c.bf16 %v1603, %v1599
        %v1716 = vpack.c.bf16 %v1608, %v1604
        %v1717 = vpack.c.bf16 %v1609, %v1605
        %v1718 = vpack.c.bf16 %v1610, %v1606
        %v1719 = vpack.c.bf16 %v1611, %v1607
        %v1720 = vpack.c.bf16 %v1616, %v1612
        %v1721 = vpack.c.bf16 %v1617, %v1613
        %v1722 = vpack.c.bf16 %v1618, %v1614
        %v1723 = vpack.c.bf16 %v1619, %v1615
        %v1724 = vpack.c.bf16 %v1624, %v1620
        %v1725 = vpack.c.bf16 %v1625, %v1621
        %v1726 = vpack.c.bf16 %v1626, %v1622
        %v1727 = vpack.c.bf16 %v1627, %v1623
        %v1728 = vpack.c.bf16 %v1632, %v1628
        %v1729 = vpack.c.bf16 %v1633, %v1629
        %v1730 = vpack.c.bf16 %v1634, %v1630
        %v1731 = vpack.c.bf16 %v1635, %v1631
        %v1732 = vpack.c.bf16 %v1640, %v1636
        %v1733 = vpack.c.bf16 %v1641, %v1637
        %v1734 = vpack.c.bf16 %v1642, %v1638
        %v1735 = vpack.c.bf16 %v1643, %v1639
        %v1736 = vpack.c.bf16 %v1648, %v1644
        %v1737 = vpack.c.bf16 %v1649, %v1645
        %v1738 = vpack.c.bf16 %v1650, %v1646
        %v1739 = vpack.c.bf16 %v1651, %v1647
        %v1740 = vpack.c.bf16 %v1656, %v1652
        %v1741 = vpack.c.bf16 %v1657, %v1653
        %v1742 = vpack.c.bf16 %v1658, %v1654
        %v1743 = vpack.c.bf16 %v1659, %v1655
        %v1744 = vpack.c.bf16 %v1664, %v1660
        %v1745 = vpack.c.bf16 %v1665, %v1661
        %v1746 = vpack.c.bf16 %v1666, %v1662
        %v1747 = vpack.c.bf16 %v1667, %v1663
        %v1748 = vpack.c.bf16 %v1672, %v1668
        %v1749 = vpack.c.bf16 %v1673, %v1669
        %v1750 = vpack.c.bf16 %v1674, %v1670
        %v1751 = vpack.c.bf16 %v1675, %v1671
        %v1752 = vpack.c.bf16 %v1680, %v1676
        %v1753 = vpack.c.bf16 %v1681, %v1677
        %v1754 = vpack.c.bf16 %v1682, %v1678
        %v1755 = vpack.c.bf16 %v1683, %v1679
        %v1756 = vpack.c.bf16 %v1688, %v1684
        %v1757 = vpack.c.bf16 %v1689, %v1685
        %v1758 = vpack.c.bf16 %v1690, %v1686
        %v1759 = vpack.c.bf16 %v1691, %v1687
        %v1760 = vpack.c.bf16 %v1696, %v1692
        %v1761 = vpack.c.bf16 %v1697, %v1693
        %v1762 = vpack.c.bf16 %v1698, %v1694
        %v1763 = vpack.c.bf16 %v1699, %v1695
        %v1764 = vld [vmem:[#allocation7] sm:$0xff]
        %v1765 = vld [vmem:[#allocation7 + $0x8] sm:$0xff]
        %v1766 = vld [vmem:[#allocation7 + $0x10] sm:$0xff]
        %v1767 = vld [vmem:[#allocation7 + $0x18] sm:$0xff]
        %v1768 = vld [vmem:[#allocation7 + $0x20] sm:$0xff]
        %v1769 = vld [vmem:[#allocation7 + $0x28] sm:$0xff]
        %v1770 = vld [vmem:[#allocation7 + $0x30] sm:$0xff]
        %v1771 = vld [vmem:[#allocation7 + $0x38] sm:$0xff]
        %v1772 = vld [vmem:[#allocation7 + $0x40] sm:$0xff]
        %v1773 = vld [vmem:[#allocation7 + $0x48] sm:$0xff]
        %v1774 = vld [vmem:[#allocation7 + $0x50] sm:$0xff]
        %v1775 = vld [vmem:[#allocation7 + $0x58] sm:$0xff]
        %v1776 = vld [vmem:[#allocation7 + $0x60] sm:$0xff]
        %v1777 = vld [vmem:[#allocation7 + $0x68] sm:$0xff]
        %v1778 = vld [vmem:[#allocation7 + $0x70] sm:$0xff]
        %v1779 = vld [vmem:[#allocation7 + $0x78] sm:$0xff]
        %v1780 = vld [vmem:[#allocation7 + $0x80] sm:$0xff]
        %v1781 = vld [vmem:[#allocation7 + $0x88] sm:$0xff]
        %v1782 = vld [vmem:[#allocation7 + $0x90] sm:$0xff]
        %v1783 = vld [vmem:[#allocation7 + $0x98] sm:$0xff]
        %v1784 = vld [vmem:[#allocation7 + $0xa0] sm:$0xff]
        %v1785 = vld [vmem:[#allocation7 + $0xa8] sm:$0xff]
        %v1786 = vld [vmem:[#allocation7 + $0xb0] sm:$0xff]
        %v1787 = vld [vmem:[#allocation7 + $0xb8] sm:$0xff]
        %v1788 = vld [vmem:[#allocation7 + $0xc0] sm:$0xff]
        %v1789 = vld [vmem:[#allocation7 + $0xc8] sm:$0xff]
        %v1790 = vld [vmem:[#allocation7 + $0xd0] sm:$0xff]
        %v1791 = vld [vmem:[#allocation7 + $0xd8] sm:$0xff]
        %v1792 = vld [vmem:[#allocation7 + $0xe0] sm:$0xff]
        %v1793 = vld [vmem:[#allocation7 + $0xe8] sm:$0xff]
        %v1794 = vld [vmem:[#allocation7 + $0xf0] sm:$0xff]
        %v1795 = vld [vmem:[#allocation7 + $0xf8] sm:$0xff]
        %v1796 = vld [vmem:[#allocation7 + $0x100] sm:$0xff]
        %v1797 = vld [vmem:[#allocation7 + $0x108] sm:$0xff]
        %v1798 = vld [vmem:[#allocation7 + $0x110] sm:$0xff]
        %v1799 = vld [vmem:[#allocation7 + $0x118] sm:$0xff]
        %v1800 = vld [vmem:[#allocation7 + $0x120] sm:$0xff]
        %v1801 = vld [vmem:[#allocation7 + $0x128] sm:$0xff]
        %v1802 = vld [vmem:[#allocation7 + $0x130] sm:$0xff]
        %v1803 = vld [vmem:[#allocation7 + $0x138] sm:$0xff]
        %v1804 = vld [vmem:[#allocation7 + $0x140] sm:$0xff]
        %v1805 = vld [vmem:[#allocation7 + $0x148] sm:$0xff]
        %v1806 = vld [vmem:[#allocation7 + $0x150] sm:$0xff]
        %v1807 = vld [vmem:[#allocation7 + $0x158] sm:$0xff]
        %v1808 = vld [vmem:[#allocation7 + $0x160] sm:$0xff]
        %v1809 = vld [vmem:[#allocation7 + $0x168] sm:$0xff]
        %v1810 = vld [vmem:[#allocation7 + $0x170] sm:$0xff]
        %v1811 = vld [vmem:[#allocation7 + $0x178] sm:$0xff]
        %v1812 = vld [vmem:[#allocation7 + $0x180] sm:$0xff]
        %v1813 = vld [vmem:[#allocation7 + $0x188] sm:$0xff]
        %v1814 = vld [vmem:[#allocation7 + $0x190] sm:$0xff]
        %v1815 = vld [vmem:[#allocation7 + $0x198] sm:$0xff]
        %v1816 = vld [vmem:[#allocation7 + $0x1a0] sm:$0xff]
        %v1817 = vld [vmem:[#allocation7 + $0x1a8] sm:$0xff]
        %v1818 = vld [vmem:[#allocation7 + $0x1b0] sm:$0xff]
        %v1819 = vld [vmem:[#allocation7 + $0x1b8] sm:$0xff]
        %v1820 = vld [vmem:[#allocation7 + $0x1c0] sm:$0xff]
        %v1821 = vld [vmem:[#allocation7 + $0x1c8] sm:$0xff]
        %v1822 = vld [vmem:[#allocation7 + $0x1d0] sm:$0xff]
        %v1823 = vld [vmem:[#allocation7 + $0x1d8] sm:$0xff]
        %v1824 = vld [vmem:[#allocation7 + $0x1e0] sm:$0xff]
        %v1825 = vld [vmem:[#allocation7 + $0x1e8] sm:$0xff]
        %v1826 = vld [vmem:[#allocation7 + $0x1f0] sm:$0xff]
        %v1827 = vld [vmem:[#allocation7 + $0x1f8] sm:$0xff]
        %v1828 = vld [vmem:[%s4] sm:$0x3]
        %v1830 = vlaneseq
        %v1831 = vshrl.u32 %v1830, 7
        %v1832 = vsub.s32 0, %v1831
        %v1833 = vrot.slane %v1828, %v1832
        %v1834 = vlaneseq
        %v1835 = vshrl.u32 %v1834, 7
        %v1836 = vsub.s32 1, %v1835
        %v1837 = vrot.slane %v1828, %v1836
        %v1904 = vunpack.c.l.b16 %v1764
        %v1905 = vunpack.c.h.b16 %v1764
        %v1906 = vunpack.c.l.b16 %v1765
        %v1907 = vunpack.c.h.b16 %v1765
        %v1908 = vunpack.c.l.b16 %v1766
        %v1909 = vunpack.c.h.b16 %v1766
        %v1910 = vunpack.c.l.b16 %v1767
        %v1911 = vunpack.c.h.b16 %v1767
        %v1912 = vunpack.c.l.b16 %v1768
        %v1913 = vunpack.c.h.b16 %v1768
        %v1914 = vunpack.c.l.b16 %v1769
        %v1915 = vunpack.c.h.b16 %v1769
        %v1916 = vunpack.c.l.b16 %v1770
        %v1917 = vunpack.c.h.b16 %v1770
        %v1918 = vunpack.c.l.b16 %v1771
        %v1919 = vunpack.c.h.b16 %v1771
        %v1920 = vunpack.c.l.b16 %v1772
        %v1921 = vunpack.c.h.b16 %v1772
        %v1922 = vunpack.c.l.b16 %v1773
        %v1923 = vunpack.c.h.b16 %v1773
        %v1924 = vunpack.c.l.b16 %v1774
        %v1925 = vunpack.c.h.b16 %v1774
        %v1926 = vunpack.c.l.b16 %v1775
        %v1927 = vunpack.c.h.b16 %v1775
        %v1928 = vunpack.c.l.b16 %v1776
        %v1929 = vunpack.c.h.b16 %v1776
        %v1930 = vunpack.c.l.b16 %v1777
        %v1931 = vunpack.c.h.b16 %v1777
        %v1932 = vunpack.c.l.b16 %v1778
        %v1933 = vunpack.c.h.b16 %v1778
        %v1934 = vunpack.c.l.b16 %v1779
        %v1935 = vunpack.c.h.b16 %v1779
        %v1936 = vunpack.c.l.b16 %v1780
        %v1937 = vunpack.c.h.b16 %v1780
        %v1938 = vunpack.c.l.b16 %v1781
        %v1939 = vunpack.c.h.b16 %v1781
        %v1940 = vunpack.c.l.b16 %v1782
        %v1941 = vunpack.c.h.b16 %v1782
        %v1942 = vunpack.c.l.b16 %v1783
        %v1943 = vunpack.c.h.b16 %v1783
        %v1944 = vunpack.c.l.b16 %v1784
        %v1945 = vunpack.c.h.b16 %v1784
        %v1946 = vunpack.c.l.b16 %v1785
        %v1947 = vunpack.c.h.b16 %v1785
        %v1948 = vunpack.c.l.b16 %v1786
        %v1949 = vunpack.c.h.b16 %v1786
        %v1950 = vunpack.c.l.b16 %v1787
        %v1951 = vunpack.c.h.b16 %v1787
        %v1952 = vunpack.c.l.b16 %v1788
        %v1953 = vunpack.c.h.b16 %v1788
        %v1954 = vunpack.c.l.b16 %v1789
        %v1955 = vunpack.c.h.b16 %v1789
        %v1956 = vunpack.c.l.b16 %v1790
        %v1957 = vunpack.c.h.b16 %v1790
        %v1958 = vunpack.c.l.b16 %v1791
        %v1959 = vunpack.c.h.b16 %v1791
        %v1960 = vunpack.c.l.b16 %v1792
        %v1961 = vunpack.c.h.b16 %v1792
        %v1962 = vunpack.c.l.b16 %v1793
        %v1963 = vunpack.c.h.b16 %v1793
        %v1964 = vunpack.c.l.b16 %v1794
        %v1965 = vunpack.c.h.b16 %v1794
        %v1966 = vunpack.c.l.b16 %v1795
        %v1967 = vunpack.c.h.b16 %v1795
        %v1968 = vunpack.c.l.b16 %v1796
        %v1969 = vunpack.c.h.b16 %v1796
        %v1970 = vunpack.c.l.b16 %v1797
        %v1971 = vunpack.c.h.b16 %v1797
        %v1972 = vunpack.c.l.b16 %v1798
        %v1973 = vunpack.c.h.b16 %v1798
        %v1974 = vunpack.c.l.b16 %v1799
        %v1975 = vunpack.c.h.b16 %v1799
        %v1976 = vunpack.c.l.b16 %v1800
        %v1977 = vunpack.c.h.b16 %v1800
        %v1978 = vunpack.c.l.b16 %v1801
        %v1979 = vunpack.c.h.b16 %v1801
        %v1980 = vunpack.c.l.b16 %v1802
        %v1981 = vunpack.c.h.b16 %v1802
        %v1982 = vunpack.c.l.b16 %v1803
        %v1983 = vunpack.c.h.b16 %v1803
        %v1984 = vunpack.c.l.b16 %v1804
        %v1985 = vunpack.c.h.b16 %v1804
        %v1986 = vunpack.c.l.b16 %v1805
        %v1987 = vunpack.c.h.b16 %v1805
        %v1988 = vunpack.c.l.b16 %v1806
        %v1989 = vunpack.c.h.b16 %v1806
        %v1990 = vunpack.c.l.b16 %v1807
        %v1991 = vunpack.c.h.b16 %v1807
        %v1992 = vunpack.c.l.b16 %v1808
        %v1993 = vunpack.c.h.b16 %v1808
        %v1994 = vunpack.c.l.b16 %v1809
        %v1995 = vunpack.c.h.b16 %v1809
        %v1996 = vunpack.c.l.b16 %v1810
        %v1997 = vunpack.c.h.b16 %v1810
        %v1998 = vunpack.c.l.b16 %v1811
        %v1999 = vunpack.c.h.b16 %v1811
        %v2000 = vunpack.c.l.b16 %v1812
        %v2001 = vunpack.c.h.b16 %v1812
        %v2002 = vunpack.c.l.b16 %v1813
        %v2003 = vunpack.c.h.b16 %v1813
        %v2004 = vunpack.c.l.b16 %v1814
        %v2005 = vunpack.c.h.b16 %v1814
        %v2006 = vunpack.c.l.b16 %v1815
        %v2007 = vunpack.c.h.b16 %v1815
        %v2008 = vunpack.c.l.b16 %v1816
        %v2009 = vunpack.c.h.b16 %v1816
        %v2010 = vunpack.c.l.b16 %v1817
        %v2011 = vunpack.c.h.b16 %v1817
        %v2012 = vunpack.c.l.b16 %v1818
        %v2013 = vunpack.c.h.b16 %v1818
        %v2014 = vunpack.c.l.b16 %v1819
        %v2015 = vunpack.c.h.b16 %v1819
        %v2016 = vunpack.c.l.b16 %v1820
        %v2017 = vunpack.c.h.b16 %v1820
        %v2018 = vunpack.c.l.b16 %v1821
        %v2019 = vunpack.c.h.b16 %v1821
        %v2020 = vunpack.c.l.b16 %v1822
        %v2021 = vunpack.c.h.b16 %v1822
        %v2022 = vunpack.c.l.b16 %v1823
        %v2023 = vunpack.c.h.b16 %v1823
        %v2024 = vunpack.c.l.b16 %v1824
        %v2025 = vunpack.c.h.b16 %v1824
        %v2026 = vunpack.c.l.b16 %v1825
        %v2027 = vunpack.c.h.b16 %v1825
        %v2028 = vunpack.c.l.b16 %v1826
        %v2029 = vunpack.c.h.b16 %v1826
        %v2030 = vunpack.c.l.b16 %v1827
        %v2031 = vunpack.c.h.b16 %v1827
        %v2032 = vpack.c.b16 %v1906, %v1904
        %v2033 = vpack.c.b16 %v1907, %v1905
        %v2034 = vpack.c.b16 %v1910, %v1908
        %v2035 = vpack.c.b16 %v1911, %v1909
        %v2036 = vpack.c.b16 %v1914, %v1912
        %v2037 = vpack.c.b16 %v1915, %v1913
        %v2038 = vpack.c.b16 %v1918, %v1916
        %v2039 = vpack.c.b16 %v1919, %v1917
        %v2040 = vpack.c.b16 %v1922, %v1920
        %v2041 = vpack.c.b16 %v1923, %v1921
        %v2042 = vpack.c.b16 %v1926, %v1924
        %v2043 = vpack.c.b16 %v1927, %v1925
        %v2044 = vpack.c.b16 %v1930, %v1928
        %v2045 = vpack.c.b16 %v1931, %v1929
        %v2046 = vpack.c.b16 %v1934, %v1932
        %v2047 = vpack.c.b16 %v1935, %v1933
        %v2048 = vpack.c.b16 %v1938, %v1936
        %v2049 = vpack.c.b16 %v1939, %v1937
        %v2050 = vpack.c.b16 %v1942, %v1940
        %v2051 = vpack.c.b16 %v1943, %v1941
        %v2052 = vpack.c.b16 %v1946, %v1944
        %v2053 = vpack.c.b16 %v1947, %v1945
        %v2054 = vpack.c.b16 %v1950, %v1948
        %v2055 = vpack.c.b16 %v1951, %v1949
        %v2056 = vpack.c.b16 %v1954, %v1952
        %v2057 = vpack.c.b16 %v1955, %v1953
        %v2058 = vpack.c.b16 %v1958, %v1956
        %v2059 = vpack.c.b16 %v1959, %v1957
        %v2060 = vpack.c.b16 %v1962, %v1960
        %v2061 = vpack.c.b16 %v1963, %v1961
        %v2062 = vpack.c.b16 %v1966, %v1964
        %v2063 = vpack.c.b16 %v1967, %v1965
        %v2064 = vpack.c.b16 %v1970, %v1968
        %v2065 = vpack.c.b16 %v1971, %v1969
        %v2066 = vpack.c.b16 %v1974, %v1972
        %v2067 = vpack.c.b16 %v1975, %v1973
        %v2068 = vpack.c.b16 %v1978, %v1976
        %v2069 = vpack.c.b16 %v1979, %v1977
        %v2070 = vpack.c.b16 %v1982, %v1980
        %v2071 = vpack.c.b16 %v1983, %v1981
        %v2072 = vpack.c.b16 %v1986, %v1984
        %v2073 = vpack.c.b16 %v1987, %v1985
        %v2074 = vpack.c.b16 %v1990, %v1988
        %v2075 = vpack.c.b16 %v1991, %v1989
        %v2076 = vpack.c.b16 %v1994, %v1992
        %v2077 = vpack.c.b16 %v1995, %v1993
        %v2078 = vpack.c.b16 %v1998, %v1996
        %v2079 = vpack.c.b16 %v1999, %v1997
        %v2080 = vpack.c.b16 %v2002, %v2000
        %v2081 = vpack.c.b16 %v2003, %v2001
        %v2082 = vpack.c.b16 %v2006, %v2004
        %v2083 = vpack.c.b16 %v2007, %v2005
        %v2084 = vpack.c.b16 %v2010, %v2008
        %v2085 = vpack.c.b16 %v2011, %v2009
        %v2086 = vpack.c.b16 %v2014, %v2012
        %v2087 = vpack.c.b16 %v2015, %v2013
        %v2088 = vpack.c.b16 %v2018, %v2016
        %v2089 = vpack.c.b16 %v2019, %v2017
        %v2090 = vpack.c.b16 %v2022, %v2020
        %v2091 = vpack.c.b16 %v2023, %v2021
        %v2092 = vpack.c.b16 %v2026, %v2024
        %v2093 = vpack.c.b16 %v2027, %v2025
        %v2094 = vpack.c.b16 %v2030, %v2028
        %v2095 = vpack.c.b16 %v2031, %v2029
        %2160 = vmatprep.subr.bf16.mxu0 %v2047
        %2161 = vmatpush1.bf16.msra.mxu0 %v2046
        %2162 = vmatprep.subr.bf16.mxu0 %v2045
        %2163 = vmatpush1.bf16.msra.mxu0 %v2044
        %2164 = vmatprep.subr.bf16.mxu0 %v2043
        %2165 = vmatpush1.bf16.msra.mxu0 %v2042
        %2166 = vmatprep.subr.bf16.mxu0 %v2041
        %2167 = vmatpush1.bf16.msra.mxu0 %v2040
        %2168 = vmatprep.subr.bf16.mxu0 %v2039
        %2169 = vmatpush1.bf16.msra.mxu0 %v2038
        %2170 = vmatprep.subr.bf16.mxu0 %v2037
        %2171 = vmatpush1.bf16.msra.mxu0 %v2036
        %2172 = vmatprep.subr.bf16.mxu0 %v2035
        %2173 = vmatpush1.bf16.msra.mxu0 %v2034
        %2174 = vmatprep.subr.bf16.mxu0 %v2033
        %2175 = vmatpush1.bf16.msra.mxu0 %v2032
        %2176 = vmatprep.subr.bf16.mxu0 %v2063
        %2177 = vmatpush2.bf16.msra.mxu0 %v2062
        %2178 = vmatprep.subr.bf16.mxu0 %v2061
        %2179 = vmatpush2.bf16.msra.mxu0 %v2060
        %2180 = vmatprep.subr.bf16.mxu0 %v2059
        %2181 = vmatpush2.bf16.msra.mxu0 %v2058
        %2182 = vmatprep.subr.bf16.mxu0 %v2057
        %2183 = vmatpush2.bf16.msra.mxu0 %v2056
        %2184 = vmatprep.subr.bf16.mxu0 %v2055
        %2185 = vmatpush2.bf16.msra.mxu0 %v2054
        %2186 = vmatprep.subr.bf16.mxu0 %v2053
        %2187 = vmatpush2.bf16.msra.mxu0 %v2052
        %2188 = vmatprep.subr.bf16.mxu0 %v2051
        %2189 = vmatpush2.bf16.msra.mxu0 %v2050
        %2190 = vmatprep.subr.bf16.mxu0 %v2049
        %2191 = vmatpush2.bf16.msra.mxu0 %v2048
        %2192 = vmatprep.mubr.bf16.mxu0 %v1701
        %2193 = vmatmul.mubr.bf16.gmra.mxu0 %v1700
        %v2194 = vpop.f32.mrf.mxu0
        %v2195 = vadd.f32 %v1833, %v2194
        %v2196 = vpop.f32.mrf.mxu0
        %v2197 = vadd.f32 %v1837, %v2196
        %v2198 = vpop.f32.mrf.mxu0
        %v2199 = vadd.f32 %v1833, %v2198
        %v2200 = vpop.f32.mrf.mxu0
        %v2201 = vadd.f32 %v1837, %v2200
        %2202 = vmatprep.mubr.bf16.mxu0 %v1705
        %2203 = vmatmul.mubr.bf16.gmra.mxu0 %v1704
        %v2204 = vpop.f32.mrf.mxu0
        %v2205 = vadd.f32 %v1833, %v2204
        %v2206 = vpop.f32.mrf.mxu0
        %v2207 = vadd.f32 %v1837, %v2206
        %v2208 = vpop.f32.mrf.mxu0
        %v2209 = vadd.f32 %v1833, %v2208
        %v2210 = vpop.f32.mrf.mxu0
        %v2211 = vadd.f32 %v1837, %v2210
        %2212 = vmatprep.mubr.bf16.mxu0 %v1709
        %2213 = vmatmul.mubr.bf16.gmra.mxu0 %v1708
        %v2214 = vpop.f32.mrf.mxu0
        %v2215 = vadd.f32 %v1833, %v2214
        %v2216 = vpop.f32.mrf.mxu0
        %v2217 = vadd.f32 %v1837, %v2216
        %v2218 = vpop.f32.mrf.mxu0
        %v2219 = vadd.f32 %v1833, %v2218
        %v2220 = vpop.f32.mrf.mxu0
        %v2221 = vadd.f32 %v1837, %v2220
        %2222 = vmatprep.mubr.bf16.mxu0 %v1713
        %2223 = vmatmul.mubr.bf16.gmra.mxu0 %v1712
        %v2224 = vpop.f32.mrf.mxu0
        %v2225 = vadd.f32 %v1833, %v2224
        %v2226 = vpop.f32.mrf.mxu0
        %v2227 = vadd.f32 %v1837, %v2226
        %v2228 = vpop.f32.mrf.mxu0
        %v2229 = vadd.f32 %v1833, %v2228
        %v2230 = vpop.f32.mrf.mxu0
        %v2231 = vadd.f32 %v1837, %v2230
        %2232 = vmatprep.mubr.bf16.mxu0 %v1717
        %2233 = vmatmul.mubr.bf16.gmra.mxu0 %v1716
        %v2234 = vpop.f32.mrf.mxu0
        %v2235 = vadd.f32 %v1833, %v2234
        %v2236 = vpop.f32.mrf.mxu0
        %v2237 = vadd.f32 %v1837, %v2236
        %v2238 = vpop.f32.mrf.mxu0
        %v2239 = vadd.f32 %v1833, %v2238
        %v2240 = vpop.f32.mrf.mxu0
        %v2241 = vadd.f32 %v1837, %v2240
        %2242 = vmatprep.mubr.bf16.mxu0 %v1721
        %2243 = vmatmul.mubr.bf16.gmra.mxu0 %v1720
        %v2244 = vpop.f32.mrf.mxu0
        %v2245 = vadd.f32 %v1833, %v2244
        %v2246 = vpop.f32.mrf.mxu0
        %v2247 = vadd.f32 %v1837, %v2246
        %v2248 = vpop.f32.mrf.mxu0
        %v2249 = vadd.f32 %v1833, %v2248
        %v2250 = vpop.f32.mrf.mxu0
        %v2251 = vadd.f32 %v1837, %v2250
        %2252 = vmatprep.mubr.bf16.mxu0 %v1725
        %2253 = vmatmul.mubr.bf16.gmra.mxu0 %v1724
        %v2254 = vpop.f32.mrf.mxu0
        %v2255 = vadd.f32 %v1833, %v2254
        %v2256 = vpop.f32.mrf.mxu0
        %v2257 = vadd.f32 %v1837, %v2256
        %v2258 = vpop.f32.mrf.mxu0
        %v2259 = vadd.f32 %v1833, %v2258
        %v2260 = vpop.f32.mrf.mxu0
        %v2261 = vadd.f32 %v1837, %v2260
        %2262 = vmatprep.mubr.bf16.mxu0 %v1729
        %2263 = vmatmul.mubr.bf16.gmra.mxu0 %v1728
        %v2264 = vpop.f32.mrf.mxu0
        %v2265 = vadd.f32 %v1833, %v2264
        %v2266 = vpop.f32.mrf.mxu0
        %v2267 = vadd.f32 %v1837, %v2266
        %v2268 = vpop.f32.mrf.mxu0
        %v2269 = vadd.f32 %v1833, %v2268
        %v2270 = vpop.f32.mrf.mxu0
        %v2271 = vadd.f32 %v1837, %v2270
        %2272 = vmatprep.mubr.bf16.mxu0 %v1733
        %2273 = vmatmul.mubr.bf16.gmra.mxu0 %v1732
        %v2274 = vpop.f32.mrf.mxu0
        %v2275 = vadd.f32 %v1833, %v2274
        %v2276 = vpop.f32.mrf.mxu0
        %v2277 = vadd.f32 %v1837, %v2276
        %v2278 = vpop.f32.mrf.mxu0
        %v2279 = vadd.f32 %v1833, %v2278
        %v2280 = vpop.f32.mrf.mxu0
        %v2281 = vadd.f32 %v1837, %v2280
        %2282 = vmatprep.mubr.bf16.mxu0 %v1737
        %2283 = vmatmul.mubr.bf16.gmra.mxu0 %v1736
        %v2284 = vpop.f32.mrf.mxu0
        %v2285 = vadd.f32 %v1833, %v2284
        %v2286 = vpop.f32.mrf.mxu0
        %v2287 = vadd.f32 %v1837, %v2286
        %v2288 = vpop.f32.mrf.mxu0
        %v2289 = vadd.f32 %v1833, %v2288
        %v2290 = vpop.f32.mrf.mxu0
        %v2291 = vadd.f32 %v1837, %v2290
        %2292 = vmatprep.mubr.bf16.mxu0 %v1741
        %2293 = vmatmul.mubr.bf16.gmra.mxu0 %v1740
        %v2294 = vpop.f32.mrf.mxu0
        %v2295 = vadd.f32 %v1833, %v2294
        %v2296 = vpop.f32.mrf.mxu0
        %v2297 = vadd.f32 %v1837, %v2296
        %v2298 = vpop.f32.mrf.mxu0
        %v2299 = vadd.f32 %v1833, %v2298
        %v2300 = vpop.f32.mrf.mxu0
        %v2301 = vadd.f32 %v1837, %v2300
        %2302 = vmatprep.mubr.bf16.mxu0 %v1745
        %2303 = vmatmul.mubr.bf16.gmra.mxu0 %v1744
        %v2304 = vpop.f32.mrf.mxu0
        %v2305 = vadd.f32 %v1833, %v2304
        %v2306 = vpop.f32.mrf.mxu0
        %v2307 = vadd.f32 %v1837, %v2306
        %v2308 = vpop.f32.mrf.mxu0
        %v2309 = vadd.f32 %v1833, %v2308
        %v2310 = vpop.f32.mrf.mxu0
        %v2311 = vadd.f32 %v1837, %v2310
        %2312 = vmatprep.mubr.bf16.mxu0 %v1749
        %2313 = vmatmul.mubr.bf16.gmra.mxu0 %v1748
        %v2314 = vpop.f32.mrf.mxu0
        %v2315 = vadd.f32 %v1833, %v2314
        %v2316 = vpop.f32.mrf.mxu0
        %v2317 = vadd.f32 %v1837, %v2316
        %v2318 = vpop.f32.mrf.mxu0
        %v2319 = vadd.f32 %v1833, %v2318
        %v2320 = vpop.f32.mrf.mxu0
        %v2321 = vadd.f32 %v1837, %v2320
        %2322 = vmatprep.mubr.bf16.mxu0 %v1753
        %2323 = vmatmul.mubr.bf16.gmra.mxu0 %v1752
        %v2324 = vpop.f32.mrf.mxu0
        %v2325 = vadd.f32 %v1833, %v2324
        %v2326 = vpop.f32.mrf.mxu0
        %v2327 = vadd.f32 %v1837, %v2326
        %v2328 = vpop.f32.mrf.mxu0
        %v2329 = vadd.f32 %v1833, %v2328
        %v2330 = vpop.f32.mrf.mxu0
        %v2331 = vadd.f32 %v1837, %v2330
        %2332 = vmatprep.mubr.bf16.mxu0 %v1757
        %2333 = vmatmul.mubr.bf16.gmra.mxu0 %v1756
        %v2334 = vpop.f32.mrf.mxu0
        %v2335 = vadd.f32 %v1833, %v2334
        %v2336 = vpop.f32.mrf.mxu0
        %v2337 = vadd.f32 %v1837, %v2336
        %v2338 = vpop.f32.mrf.mxu0
        %v2339 = vadd.f32 %v1833, %v2338
        %v2340 = vpop.f32.mrf.mxu0
        %v2341 = vadd.f32 %v1837, %v2340
        %2342 = vmatprep.mubr.bf16.mxu0 %v1761
        %2343 = vmatmul.mubr.bf16.gmra.mxu0 %v1760
        %v2344 = vpop.f32.mrf.mxu0
        %v2345 = vadd.f32 %v1833, %v2344
        %v2346 = vpop.f32.mrf.mxu0
        %v2347 = vadd.f32 %v1837, %v2346
        %v2348 = vpop.f32.mrf.mxu0
        %v2349 = vadd.f32 %v1833, %v2348
        %v2350 = vpop.f32.mrf.mxu0
        %v2351 = vadd.f32 %v1837, %v2350
        %2352 = vdwg.mxu0
        %2353 = vmatprep.subr.bf16.mxu0 %v2079
        %2354 = vmatpush1.bf16.msra.mxu0 %v2078
        %2355 = vmatprep.subr.bf16.mxu0 %v2077
        %2356 = vmatpush1.bf16.msra.mxu0 %v2076
        %2357 = vmatprep.subr.bf16.mxu0 %v2075
        %2358 = vmatpush1.bf16.msra.mxu0 %v2074
        %2359 = vmatprep.subr.bf16.mxu0 %v2073
        %2360 = vmatpush1.bf16.msra.mxu0 %v2072
        %2361 = vmatprep.subr.bf16.mxu0 %v2071
        %2362 = vmatpush1.bf16.msra.mxu0 %v2070
        %2363 = vmatprep.subr.bf16.mxu0 %v2069
        %2364 = vmatpush1.bf16.msra.mxu0 %v2068
        %2365 = vmatprep.subr.bf16.mxu0 %v2067
        %2366 = vmatpush1.bf16.msra.mxu0 %v2066
        %2367 = vmatprep.subr.bf16.mxu0 %v2065
        %2368 = vmatpush1.bf16.msra.mxu0 %v2064
        %2369 = vmatprep.subr.bf16.mxu0 %v2095
        %2370 = vmatpush2.bf16.msra.mxu0 %v2094
        %2371 = vmatprep.subr.bf16.mxu0 %v2093
        %2372 = vmatpush2.bf16.msra.mxu0 %v2092
        %2373 = vmatprep.subr.bf16.mxu0 %v2091
        %2374 = vmatpush2.bf16.msra.mxu0 %v2090
        %2375 = vmatprep.subr.bf16.mxu0 %v2089
        %2376 = vmatpush2.bf16.msra.mxu0 %v2088
        %2377 = vmatprep.subr.bf16.mxu0 %v2087
        %2378 = vmatpush2.bf16.msra.mxu0 %v2086
        %2379 = vmatprep.subr.bf16.mxu0 %v2085
        %2380 = vmatpush2.bf16.msra.mxu0 %v2084
        %2381 = vmatprep.subr.bf16.mxu0 %v2083
        %2382 = vmatpush2.bf16.msra.mxu0 %v2082
        %2383 = vmatprep.subr.bf16.mxu0 %v2081
        %2384 = vmatpush2.bf16.msra.mxu0 %v2080
        %2385 = vmatprep.mubr.bf16.mxu0 %v1703
        %2386 = vmatmul.mubr.bf16.gmra.mxu0 %v1702
        %v2387 = vpop.f32.mrf.mxu0
        %v2388 = vadd.f32 %v2195, %v2387
        %v2389 = vpop.f32.mrf.mxu0
        %v2390 = vadd.f32 %v2197, %v2389
        %v2391 = vpop.f32.mrf.mxu0
        %v2392 = vadd.f32 %v2199, %v2391
        %v2393 = vpop.f32.mrf.mxu0
        %v2394 = vadd.f32 %v2201, %v2393
        %2395 = vmatprep.mubr.bf16.mxu0 %v1707
        %2396 = vmatmul.mubr.bf16.gmra.mxu0 %v1706
        %v2397 = vpop.f32.mrf.mxu0
        %v2398 = vadd.f32 %v2205, %v2397
        %v2399 = vpop.f32.mrf.mxu0
        %v2400 = vadd.f32 %v2207, %v2399
        %v2401 = vpop.f32.mrf.mxu0
        %v2402 = vadd.f32 %v2209, %v2401
        %v2403 = vpop.f32.mrf.mxu0
        %v2404 = vadd.f32 %v2211, %v2403
        %2405 = vmatprep.mubr.bf16.mxu0 %v1711
        %2406 = vmatmul.mubr.bf16.gmra.mxu0 %v1710
        %v2407 = vpop.f32.mrf.mxu0
        %v2408 = vadd.f32 %v2215, %v2407
        %v2409 = vpop.f32.mrf.mxu0
        %v2410 = vadd.f32 %v2217, %v2409
        %v2411 = vpop.f32.mrf.mxu0
        %v2412 = vadd.f32 %v2219, %v2411
        %v2413 = vpop.f32.mrf.mxu0
        %v2414 = vadd.f32 %v2221, %v2413
        %2415 = vmatprep.mubr.bf16.mxu0 %v1715
        %2416 = vmatmul.mubr.bf16.gmra.mxu0 %v1714
        %v2417 = vpop.f32.mrf.mxu0
        %v2418 = vadd.f32 %v2225, %v2417
        %v2419 = vpop.f32.mrf.mxu0
        %v2420 = vadd.f32 %v2227, %v2419
        %v2421 = vpop.f32.mrf.mxu0
        %v2422 = vadd.f32 %v2229, %v2421
        %v2423 = vpop.f32.mrf.mxu0
        %v2424 = vadd.f32 %v2231, %v2423
        %2425 = vmatprep.mubr.bf16.mxu0 %v1719
        %2426 = vmatmul.mubr.bf16.gmra.mxu0 %v1718
        %v2427 = vpop.f32.mrf.mxu0
        %v2428 = vadd.f32 %v2235, %v2427
        %v2429 = vpop.f32.mrf.mxu0
        %v2430 = vadd.f32 %v2237, %v2429
        %v2431 = vpop.f32.mrf.mxu0
        %v2432 = vadd.f32 %v2239, %v2431
        %v2433 = vpop.f32.mrf.mxu0
        %v2434 = vadd.f32 %v2241, %v2433
        %2435 = vmatprep.mubr.bf16.mxu0 %v1723
        %2436 = vmatmul.mubr.bf16.gmra.mxu0 %v1722
        %v2437 = vpop.f32.mrf.mxu0
        %v2438 = vadd.f32 %v2245, %v2437
        %v2439 = vpop.f32.mrf.mxu0
        %v2440 = vadd.f32 %v2247, %v2439
        %v2441 = vpop.f32.mrf.mxu0
        %v2442 = vadd.f32 %v2249, %v2441
        %v2443 = vpop.f32.mrf.mxu0
        %v2444 = vadd.f32 %v2251, %v2443
        %2445 = vmatprep.mubr.bf16.mxu0 %v1727
        %2446 = vmatmul.mubr.bf16.gmra.mxu0 %v1726
        %v2447 = vpop.f32.mrf.mxu0
        %v2448 = vadd.f32 %v2255, %v2447
        %v2449 = vpop.f32.mrf.mxu0
        %v2450 = vadd.f32 %v2257, %v2449
        %v2451 = vpop.f32.mrf.mxu0
        %v2452 = vadd.f32 %v2259, %v2451
        %v2453 = vpop.f32.mrf.mxu0
        %v2454 = vadd.f32 %v2261, %v2453
        %2455 = vmatprep.mubr.bf16.mxu0 %v1731
        %2456 = vmatmul.mubr.bf16.gmra.mxu0 %v1730
        %v2457 = vpop.f32.mrf.mxu0
        %v2458 = vadd.f32 %v2265, %v2457
        %v2459 = vpop.f32.mrf.mxu0
        %v2460 = vadd.f32 %v2267, %v2459
        %v2461 = vpop.f32.mrf.mxu0
        %v2462 = vadd.f32 %v2269, %v2461
        %v2463 = vpop.f32.mrf.mxu0
        %v2464 = vadd.f32 %v2271, %v2463
        %2465 = vmatprep.mubr.bf16.mxu0 %v1735
        %2466 = vmatmul.mubr.bf16.gmra.mxu0 %v1734
        %v2467 = vpop.f32.mrf.mxu0
        %v2468 = vadd.f32 %v2275, %v2467
        %v2469 = vpop.f32.mrf.mxu0
        %v2470 = vadd.f32 %v2277, %v2469
        %v2471 = vpop.f32.mrf.mxu0
        %v2472 = vadd.f32 %v2279, %v2471
        %v2473 = vpop.f32.mrf.mxu0
        %v2474 = vadd.f32 %v2281, %v2473
        %2475 = vmatprep.mubr.bf16.mxu0 %v1739
        %2476 = vmatmul.mubr.bf16.gmra.mxu0 %v1738
        %v2477 = vpop.f32.mrf.mxu0
        %v2478 = vadd.f32 %v2285, %v2477
        %v2479 = vpop.f32.mrf.mxu0
        %v2480 = vadd.f32 %v2287, %v2479
        %v2481 = vpop.f32.mrf.mxu0
        %v2482 = vadd.f32 %v2289, %v2481
        %v2483 = vpop.f32.mrf.mxu0
        %v2484 = vadd.f32 %v2291, %v2483
        %2485 = vmatprep.mubr.bf16.mxu0 %v1743
        %2486 = vmatmul.mubr.bf16.gmra.mxu0 %v1742
        %v2487 = vpop.f32.mrf.mxu0
        %v2488 = vadd.f32 %v2295, %v2487
        %v2489 = vpop.f32.mrf.mxu0
        %v2490 = vadd.f32 %v2297, %v2489
        %v2491 = vpop.f32.mrf.mxu0
        %v2492 = vadd.f32 %v2299, %v2491
        %v2493 = vpop.f32.mrf.mxu0
        %v2494 = vadd.f32 %v2301, %v2493
        %2495 = vmatprep.mubr.bf16.mxu0 %v1747
        %2496 = vmatmul.mubr.bf16.gmra.mxu0 %v1746
        %v2497 = vpop.f32.mrf.mxu0
        %v2498 = vadd.f32 %v2305, %v2497
        %v2499 = vpop.f32.mrf.mxu0
        %v2500 = vadd.f32 %v2307, %v2499
        %v2501 = vpop.f32.mrf.mxu0
        %v2502 = vadd.f32 %v2309, %v2501
        %v2503 = vpop.f32.mrf.mxu0
        %v2504 = vadd.f32 %v2311, %v2503
        %2505 = vmatprep.mubr.bf16.mxu0 %v1751
        %2506 = vmatmul.mubr.bf16.gmra.mxu0 %v1750
        %v2507 = vpop.f32.mrf.mxu0
        %v2508 = vadd.f32 %v2315, %v2507
        %v2509 = vpop.f32.mrf.mxu0
        %v2510 = vadd.f32 %v2317, %v2509
        %v2511 = vpop.f32.mrf.mxu0
        %v2512 = vadd.f32 %v2319, %v2511
        %v2513 = vpop.f32.mrf.mxu0
        %v2514 = vadd.f32 %v2321, %v2513
        %2515 = vmatprep.mubr.bf16.mxu0 %v1755
        %2516 = vmatmul.mubr.bf16.gmra.mxu0 %v1754
        %v2517 = vpop.f32.mrf.mxu0
        %v2518 = vadd.f32 %v2325, %v2517
        %v2519 = vpop.f32.mrf.mxu0
        %v2520 = vadd.f32 %v2327, %v2519
        %v2521 = vpop.f32.mrf.mxu0
        %v2522 = vadd.f32 %v2329, %v2521
        %v2523 = vpop.f32.mrf.mxu0
        %v2524 = vadd.f32 %v2331, %v2523
        %2525 = vmatprep.mubr.bf16.mxu0 %v1759
        %2526 = vmatmul.mubr.bf16.gmra.mxu0 %v1758
        %v2527 = vpop.f32.mrf.mxu0
        %v2528 = vadd.f32 %v2335, %v2527
        %v2529 = vpop.f32.mrf.mxu0
        %v2530 = vadd.f32 %v2337, %v2529
        %v2531 = vpop.f32.mrf.mxu0
        %v2532 = vadd.f32 %v2339, %v2531
        %v2533 = vpop.f32.mrf.mxu0
        %v2534 = vadd.f32 %v2341, %v2533
        %2535 = vmatprep.mubr.bf16.mxu0 %v1763
        %2536 = vmatmul.mubr.bf16.gmra.mxu0 %v1762
        %v2537 = vpop.f32.mrf.mxu0
        %v2538 = vadd.f32 %v2345, %v2537
        %v2539 = vpop.f32.mrf.mxu0
        %v2540 = vadd.f32 %v2347, %v2539
        %v2541 = vpop.f32.mrf.mxu0
        %v2542 = vadd.f32 %v2349, %v2541
        %v2543 = vpop.f32.mrf.mxu0
        %v2544 = vadd.f32 %v2351, %v2543
        %2545 = vdwg.mxu0
        %vm2546 = vcmp.gt.f32.partialorder %v2388, 0.0
        %vm2547 = vcmp.gt.f32.partialorder %v2390, 0.0
        %vm2548 = vcmp.gt.f32.partialorder %v2392, 0.0
        %vm2549 = vcmp.gt.f32.partialorder %v2394, 0.0
        %vm2550 = vcmp.gt.f32.partialorder %v2398, 0.0
        %vm2551 = vcmp.gt.f32.partialorder %v2400, 0.0
        %vm2552 = vcmp.gt.f32.partialorder %v2402, 0.0
        %vm2553 = vcmp.gt.f32.partialorder %v2404, 0.0
        %vm2554 = vcmp.gt.f32.partialorder %v2408, 0.0
        %vm2555 = vcmp.gt.f32.partialorder %v2410, 0.0
        %vm2556 = vcmp.gt.f32.partialorder %v2412, 0.0
        %vm2557 = vcmp.gt.f32.partialorder %v2414, 0.0
        %vm2558 = vcmp.gt.f32.partialorder %v2418, 0.0
        %vm2559 = vcmp.gt.f32.partialorder %v2420, 0.0
        %vm2560 = vcmp.gt.f32.partialorder %v2422, 0.0
        %vm2561 = vcmp.gt.f32.partialorder %v2424, 0.0
        %vm2562 = vcmp.gt.f32.partialorder %v2428, 0.0
        %vm2563 = vcmp.gt.f32.partialorder %v2430, 0.0
        %vm2564 = vcmp.gt.f32.partialorder %v2432, 0.0
        %vm2565 = vcmp.gt.f32.partialorder %v2434, 0.0
        %vm2566 = vcmp.gt.f32.partialorder %v2438, 0.0
        %vm2567 = vcmp.gt.f32.partialorder %v2440, 0.0
        %vm2568 = vcmp.gt.f32.partialorder %v2442, 0.0
        %vm2569 = vcmp.gt.f32.partialorder %v2444, 0.0
        %vm2570 = vcmp.gt.f32.partialorder %v2448, 0.0
        %vm2571 = vcmp.gt.f32.partialorder %v2450, 0.0
        %vm2572 = vcmp.gt.f32.partialorder %v2452, 0.0
        %vm2573 = vcmp.gt.f32.partialorder %v2454, 0.0
        %vm2574 = vcmp.gt.f32.partialorder %v2458, 0.0
        %vm2575 = vcmp.gt.f32.partialorder %v2460, 0.0
        %vm2576 = vcmp.gt.f32.partialorder %v2462, 0.0
        %vm2577 = vcmp.gt.f32.partialorder %v2464, 0.0
        %vm2578 = vcmp.gt.f32.partialorder %v2468, 0.0
        %vm2579 = vcmp.gt.f32.partialorder %v2470, 0.0
        %vm2580 = vcmp.gt.f32.partialorder %v2472, 0.0
        %vm2581 = vcmp.gt.f32.partialorder %v2474, 0.0
        %vm2582 = vcmp.gt.f32.partialorder %v2478, 0.0
        %vm2583 = vcmp.gt.f32.partialorder %v2480, 0.0
        %vm2584 = vcmp.gt.f32.partialorder %v2482, 0.0
        %vm2585 = vcmp.gt.f32.partialorder %v2484, 0.0
        %vm2586 = vcmp.gt.f32.partialorder %v2488, 0.0
        %vm2587 = vcmp.gt.f32.partialorder %v2490, 0.0
        %vm2588 = vcmp.gt.f32.partialorder %v2492, 0.0
        %vm2589 = vcmp.gt.f32.partialorder %v2494, 0.0
        %vm2590 = vcmp.gt.f32.partialorder %v2498, 0.0
        %vm2591 = vcmp.gt.f32.partialorder %v2500, 0.0
        %vm2592 = vcmp.gt.f32.partialorder %v2502, 0.0
        %vm2593 = vcmp.gt.f32.partialorder %v2504, 0.0
        %vm2594 = vcmp.gt.f32.partialorder %v2508, 0.0
        %vm2595 = vcmp.gt.f32.partialorder %v2510, 0.0
        %vm2596 = vcmp.gt.f32.partialorder %v2512, 0.0
        %vm2597 = vcmp.gt.f32.partialorder %v2514, 0.0
        %vm2598 = vcmp.gt.f32.partialorder %v2518, 0.0
        %vm2599 = vcmp.gt.f32.partialorder %v2520, 0.0
        %vm2600 = vcmp.gt.f32.partialorder %v2522, 0.0
        %vm2601 = vcmp.gt.f32.partialorder %v2524, 0.0
        %vm2602 = vcmp.gt.f32.partialorder %v2528, 0.0
        %vm2603 = vcmp.gt.f32.partialorder %v2530, 0.0
        %vm2604 = vcmp.gt.f32.partialorder %v2532, 0.0
        %vm2605 = vcmp.gt.f32.partialorder %v2534, 0.0
        %vm2606 = vcmp.gt.f32.partialorder %v2538, 0.0
        %vm2607 = vcmp.gt.f32.partialorder %v2540, 0.0
        %vm2608 = vcmp.gt.f32.partialorder %v2542, 0.0
        %vm2609 = vcmp.gt.f32.partialorder %v2544, 0.0
        %v2610 = vmul.f32 %v2388, 0.2
        %v2611 = vmul.f32 %v2390, 0.2
        %v2612 = vmul.f32 %v2392, 0.2
        %v2613 = vmul.f32 %v2394, 0.2
        %v2614 = vmul.f32 %v2398, 0.2
        %v2615 = vmul.f32 %v2400, 0.2
        %v2616 = vmul.f32 %v2402, 0.2
        %v2617 = vmul.f32 %v2404, 0.2
        %v2618 = vmul.f32 %v2408, 0.2
        %v2619 = vmul.f32 %v2410, 0.2
        %v2620 = vmul.f32 %v2412, 0.2
        %v2621 = vmul.f32 %v2414, 0.2
        %v2622 = vmul.f32 %v2418, 0.2
        %v2623 = vmul.f32 %v2420, 0.2
        %v2624 = vmul.f32 %v2422, 0.2
        %v2625 = vmul.f32 %v2424, 0.2
        %v2626 = vmul.f32 %v2428, 0.2
        %v2627 = vmul.f32 %v2430, 0.2
        %v2628 = vmul.f32 %v2432, 0.2
        %v2629 = vmul.f32 %v2434, 0.2
        %v2630 = vmul.f32 %v2438, 0.2
        %v2631 = vmul.f32 %v2440, 0.2
        %v2632 = vmul.f32 %v2442, 0.2
        %v2633 = vmul.f32 %v2444, 0.2
        %v2634 = vmul.f32 %v2448, 0.2
        %v2635 = vmul.f32 %v2450, 0.2
        %v2636 = vmul.f32 %v2452, 0.2
        %v2637 = vmul.f32 %v2454, 0.2
        %v2638 = vmul.f32 %v2458, 0.2
        %v2639 = vmul.f32 %v2460, 0.2
        %v2640 = vmul.f32 %v2462, 0.2
        %v2641 = vmul.f32 %v2464, 0.2
        %v2642 = vmul.f32 %v2468, 0.2
        %v2643 = vmul.f32 %v2470, 0.2
        %v2644 = vmul.f32 %v2472, 0.2
        %v2645 = vmul.f32 %v2474, 0.2
        %v2646 = vmul.f32 %v2478, 0.2
        %v2647 = vmul.f32 %v2480, 0.2
        %v2648 = vmul.f32 %v2482, 0.2
        %v2649 = vmul.f32 %v2484, 0.2
        %v2650 = vmul.f32 %v2488, 0.2
        %v2651 = vmul.f32 %v2490, 0.2
        %v2652 = vmul.f32 %v2492, 0.2
        %v2653 = vmul.f32 %v2494, 0.2
        %v2654 = vmul.f32 %v2498, 0.2
        %v2655 = vmul.f32 %v2500, 0.2
        %v2656 = vmul.f32 %v2502, 0.2
        %v2657 = vmul.f32 %v2504, 0.2
        %v2658 = vmul.f32 %v2508, 0.2
        %v2659 = vmul.f32 %v2510, 0.2
        %v2660 = vmul.f32 %v2512, 0.2
        %v2661 = vmul.f32 %v2514, 0.2
        %v2662 = vmul.f32 %v2518, 0.2
        %v2663 = vmul.f32 %v2520, 0.2
        %v2664 = vmul.f32 %v2522, 0.2
        %v2665 = vmul.f32 %v2524, 0.2
        %v2666 = vmul.f32 %v2528, 0.2
        %v2667 = vmul.f32 %v2530, 0.2
        %v2668 = vmul.f32 %v2532, 0.2
        %v2669 = vmul.f32 %v2534, 0.2
        %v2670 = vmul.f32 %v2538, 0.2
        %v2671 = vmul.f32 %v2540, 0.2
        %v2672 = vmul.f32 %v2542, 0.2
        %v2673 = vmul.f32 %v2544, 0.2
        %v2674 = vsel %vm2546, %v2388, %v2610
        %v2675 = vsel %vm2547, %v2390, %v2611
        %v2676 = vsel %vm2548, %v2392, %v2612
        %v2677 = vsel %vm2549, %v2394, %v2613
        %v2678 = vsel %vm2550, %v2398, %v2614
        %v2679 = vsel %vm2551, %v2400, %v2615
        %v2680 = vsel %vm2552, %v2402, %v2616
        %v2681 = vsel %vm2553, %v2404, %v2617
        %v2682 = vsel %vm2554, %v2408, %v2618
        %v2683 = vsel %vm2555, %v2410, %v2619
        %v2684 = vsel %vm2556, %v2412, %v2620
        %v2685 = vsel %vm2557, %v2414, %v2621
        %v2686 = vsel %vm2558, %v2418, %v2622
        %v2687 = vsel %vm2559, %v2420, %v2623
        %v2688 = vsel %vm2560, %v2422, %v2624
        %v2689 = vsel %vm2561, %v2424, %v2625
        %v2690 = vsel %vm2562, %v2428, %v2626
        %v2691 = vsel %vm2563, %v2430, %v2627
        %v2692 = vsel %vm2564, %v2432, %v2628
        %v2693 = vsel %vm2565, %v2434, %v2629
        %v2694 = vsel %vm2566, %v2438, %v2630
        %v2695 = vsel %vm2567, %v2440, %v2631
        %v2696 = vsel %vm2568, %v2442, %v2632
        %v2697 = vsel %vm2569, %v2444, %v2633
        %v2698 = vsel %vm2570, %v2448, %v2634
        %v2699 = vsel %vm2571, %v2450, %v2635
        %v2700 = vsel %vm2572, %v2452, %v2636
        %v2701 = vsel %vm2573, %v2454, %v2637
        %v2702 = vsel %vm2574, %v2458, %v2638
        %v2703 = vsel %vm2575, %v2460, %v2639
        %v2704 = vsel %vm2576, %v2462, %v2640
        %v2705 = vsel %vm2577, %v2464, %v2641
        %v2706 = vsel %vm2578, %v2468, %v2642
        %v2707 = vsel %vm2579, %v2470, %v2643
        %v2708 = vsel %vm2580, %v2472, %v2644
        %v2709 = vsel %vm2581, %v2474, %v2645
        %v2710 = vsel %vm2582, %v2478, %v2646
        %v2711 = vsel %vm2583, %v2480, %v2647
        %v2712 = vsel %vm2584, %v2482, %v2648
        %v2713 = vsel %vm2585, %v2484, %v2649
        %v2714 = vsel %vm2586, %v2488, %v2650
        %v2715 = vsel %vm2587, %v2490, %v2651
        %v2716 = vsel %vm2588, %v2492, %v2652
        %v2717 = vsel %vm2589, %v2494, %v2653
        %v2718 = vsel %vm2590, %v2498, %v2654
        %v2719 = vsel %vm2591, %v2500, %v2655
        %v2720 = vsel %vm2592, %v2502, %v2656
        %v2721 = vsel %vm2593, %v2504, %v2657
        %v2722 = vsel %vm2594, %v2508, %v2658
        %v2723 = vsel %vm2595, %v2510, %v2659
        %v2724 = vsel %vm2596, %v2512, %v2660
        %v2725 = vsel %vm2597, %v2514, %v2661
        %v2726 = vsel %vm2598, %v2518, %v2662
        %v2727 = vsel %vm2599, %v2520, %v2663
        %v2728 = vsel %vm2600, %v2522, %v2664
        %v2729 = vsel %vm2601, %v2524, %v2665
        %v2730 = vsel %vm2602, %v2528, %v2666
        %v2731 = vsel %vm2603, %v2530, %v2667
        %v2732 = vsel %vm2604, %v2532, %v2668
        %v2733 = vsel %vm2605, %v2534, %v2669
        %v2734 = vsel %vm2606, %v2538, %v2670
        %v2735 = vsel %vm2607, %v2540, %v2671
        %v2736 = vsel %vm2608, %v2542, %v2672
        %v2737 = vsel %vm2609, %v2544, %v2673
        %v2738 = vld [vmem:[%s5] sm:$0x3]
        %v2739 = vunpack.c.l.bf16 %v2738
        %v2741 = vlaneseq
        %v2742 = vshrl.u32 %v2741, 7
        %v2743 = vsub.s32 0, %v2742
        %v2744 = vrot.slane %v2739, %v2743
        %v2745 = vlaneseq
        %v2746 = vshrl.u32 %v2745, 7
        %v2747 = vsub.s32 2, %v2746
        %v2748 = vrot.slane %v2739, %v2747
        %v2751 = vlaneseq
        %v2752 = vshrl.u32 %v2751, 7
        %v2753 = vsub.s32 0, %v2752
        %v2754 = vrot.slane %v2744, %v2753
        %v2755 = vlaneseq
        %v2756 = vshrl.u32 %v2755, 7
        %v2757 = vsub.s32 0, %v2756
        %v2758 = vrot.slane %v2748, %v2757
        %v2759 = vmul.f32 %v2674, %v2754
        %v2760 = vmul.f32 %v2675, %v2758
        %v2761 = vmul.f32 %v2676, %v2754
        %v2762 = vmul.f32 %v2677, %v2758
        %v2763 = vmul.f32 %v2678, %v2754
        %v2764 = vmul.f32 %v2679, %v2758
        %v2765 = vmul.f32 %v2680, %v2754
        %v2766 = vmul.f32 %v2681, %v2758
        %v2767 = vmul.f32 %v2682, %v2754
        %v2768 = vmul.f32 %v2683, %v2758
        %v2769 = vmul.f32 %v2684, %v2754
        %v2770 = vmul.f32 %v2685, %v2758
        %v2771 = vmul.f32 %v2686, %v2754
        %v2772 = vmul.f32 %v2687, %v2758
        %v2773 = vmul.f32 %v2688, %v2754
        %v2774 = vmul.f32 %v2689, %v2758
        %v2775 = vmul.f32 %v2690, %v2754
        %v2776 = vmul.f32 %v2691, %v2758
        %v2777 = vmul.f32 %v2692, %v2754
        %v2778 = vmul.f32 %v2693, %v2758
        %v2779 = vmul.f32 %v2694, %v2754
        %v2780 = vmul.f32 %v2695, %v2758
        %v2781 = vmul.f32 %v2696, %v2754
        %v2782 = vmul.f32 %v2697, %v2758
        %v2783 = vmul.f32 %v2698, %v2754
        %v2784 = vmul.f32 %v2699, %v2758
        %v2785 = vmul.f32 %v2700, %v2754
        %v2786 = vmul.f32 %v2701, %v2758
        %v2787 = vmul.f32 %v2702, %v2754
        %v2788 = vmul.f32 %v2703, %v2758
        %v2789 = vmul.f32 %v2704, %v2754
        %v2790 = vmul.f32 %v2705, %v2758
        %v2791 = vmul.f32 %v2706, %v2754
        %v2792 = vmul.f32 %v2707, %v2758
        %v2793 = vmul.f32 %v2708, %v2754
        %v2794 = vmul.f32 %v2709, %v2758
        %v2795 = vmul.f32 %v2710, %v2754
        %v2796 = vmul.f32 %v2711, %v2758
        %v2797 = vmul.f32 %v2712, %v2754
        %v2798 = vmul.f32 %v2713, %v2758
        %v2799 = vmul.f32 %v2714, %v2754
        %v2800 = vmul.f32 %v2715, %v2758
        %v2801 = vmul.f32 %v2716, %v2754
        %v2802 = vmul.f32 %v2717, %v2758
        %v2803 = vmul.f32 %v2718, %v2754
        %v2804 = vmul.f32 %v2719, %v2758
        %v2805 = vmul.f32 %v2720, %v2754
        %v2806 = vmul.f32 %v2721, %v2758
        %v2807 = vmul.f32 %v2722, %v2754
        %v2808 = vmul.f32 %v2723, %v2758
        %v2809 = vmul.f32 %v2724, %v2754
        %v2810 = vmul.f32 %v2725, %v2758
        %v2811 = vmul.f32 %v2726, %v2754
        %v2812 = vmul.f32 %v2727, %v2758
        %v2813 = vmul.f32 %v2728, %v2754
        %v2814 = vmul.f32 %v2729, %v2758
        %v2815 = vmul.f32 %v2730, %v2754
        %v2816 = vmul.f32 %v2731, %v2758
        %v2817 = vmul.f32 %v2732, %v2754
        %v2818 = vmul.f32 %v2733, %v2758
        %v2819 = vmul.f32 %v2734, %v2754
        %v2820 = vmul.f32 %v2735, %v2758
        %v2821 = vmul.f32 %v2736, %v2754
        %v2822 = vmul.f32 %v2737, %v2758
        %v2823 = vadd.f32 %v2759, %v2760
        %2824 = vadd.xlane.f32.xlu0 %v2823
        %v2825 = vpop.xlane.xlu0 %2824
        %v2826 = vadd.f32 %v2761, %v2762
        %2827 = vadd.xlane.f32.xlu0 %v2826
        %v2828 = vpop.xlane.xlu0 %2827
        %v2829 = vadd.f32 %v2763, %v2764
        %2830 = vadd.xlane.f32.xlu0 %v2829
        %v2831 = vpop.xlane.xlu0 %2830
        %v2832 = vadd.f32 %v2765, %v2766
        %2833 = vadd.xlane.f32.xlu0 %v2832
        %v2834 = vpop.xlane.xlu0 %2833
        %v2835 = vadd.f32 %v2767, %v2768
        %2836 = vadd.xlane.f32.xlu0 %v2835
        %v2837 = vpop.xlane.xlu0 %2836
        %v2838 = vadd.f32 %v2769, %v2770
        %2839 = vadd.xlane.f32.xlu0 %v2838
        %v2840 = vpop.xlane.xlu0 %2839
        %v2841 = vadd.f32 %v2771, %v2772
        %2842 = vadd.xlane.f32.xlu0 %v2841
        %v2843 = vpop.xlane.xlu0 %2842
        %v2844 = vadd.f32 %v2773, %v2774
        %2845 = vadd.xlane.f32.xlu0 %v2844
        %v2846 = vpop.xlane.xlu0 %2845
        %v2847 = vadd.f32 %v2775, %v2776
        %2848 = vadd.xlane.f32.xlu0 %v2847
        %v2849 = vpop.xlane.xlu0 %2848
        %v2850 = vadd.f32 %v2777, %v2778
        %2851 = vadd.xlane.f32.xlu0 %v2850
        %v2852 = vpop.xlane.xlu0 %2851
        %v2853 = vadd.f32 %v2779, %v2780
        %2854 = vadd.xlane.f32.xlu0 %v2853
        %v2855 = vpop.xlane.xlu0 %2854
        %v2856 = vadd.f32 %v2781, %v2782
        %2857 = vadd.xlane.f32.xlu0 %v2856
        %v2858 = vpop.xlane.xlu0 %2857
        %v2859 = vadd.f32 %v2783, %v2784
        %2860 = vadd.xlane.f32.xlu0 %v2859
        %v2861 = vpop.xlane.xlu0 %2860
        %v2862 = vadd.f32 %v2785, %v2786
        %2863 = vadd.xlane.f32.xlu0 %v2862
        %v2864 = vpop.xlane.xlu0 %2863
        %v2865 = vadd.f32 %v2787, %v2788
        %2866 = vadd.xlane.f32.xlu0 %v2865
        %v2867 = vpop.xlane.xlu0 %2866
        %v2868 = vadd.f32 %v2789, %v2790
        %2869 = vadd.xlane.f32.xlu0 %v2868
        %v2870 = vpop.xlane.xlu0 %2869
        %v2871 = vadd.f32 %v2791, %v2792
        %2872 = vadd.xlane.f32.xlu0 %v2871
        %v2873 = vpop.xlane.xlu0 %2872
        %v2874 = vadd.f32 %v2793, %v2794
        %2875 = vadd.xlane.f32.xlu0 %v2874
        %v2876 = vpop.xlane.xlu0 %2875
        %v2877 = vadd.f32 %v2795, %v2796
        %2878 = vadd.xlane.f32.xlu0 %v2877
        %v2879 = vpop.xlane.xlu0 %2878
        %v2880 = vadd.f32 %v2797, %v2798
        %2881 = vadd.xlane.f32.xlu0 %v2880
        %v2882 = vpop.xlane.xlu0 %2881
        %v2883 = vadd.f32 %v2799, %v2800
        %2884 = vadd.xlane.f32.xlu0 %v2883
        %v2885 = vpop.xlane.xlu0 %2884
        %v2886 = vadd.f32 %v2801, %v2802
        %2887 = vadd.xlane.f32.xlu0 %v2886
        %v2888 = vpop.xlane.xlu0 %2887
        %v2889 = vadd.f32 %v2803, %v2804
        %2890 = vadd.xlane.f32.xlu0 %v2889
        %v2891 = vpop.xlane.xlu0 %2890
        %v2892 = vadd.f32 %v2805, %v2806
        %2893 = vadd.xlane.f32.xlu0 %v2892
        %v2894 = vpop.xlane.xlu0 %2893
        %v2895 = vadd.f32 %v2807, %v2808
        %2896 = vadd.xlane.f32.xlu0 %v2895
        %v2897 = vpop.xlane.xlu0 %2896
        %v2898 = vadd.f32 %v2809, %v2810
        %2899 = vadd.xlane.f32.xlu0 %v2898
        %v2900 = vpop.xlane.xlu0 %2899
        %v2901 = vadd.f32 %v2811, %v2812
        %2902 = vadd.xlane.f32.xlu0 %v2901
        %v2903 = vpop.xlane.xlu0 %2902
        %v2904 = vadd.f32 %v2813, %v2814
        %2905 = vadd.xlane.f32.xlu0 %v2904
        %v2906 = vpop.xlane.xlu0 %2905
        %v2907 = vadd.f32 %v2815, %v2816
        %2908 = vadd.xlane.f32.xlu0 %v2907
        %v2909 = vpop.xlane.xlu0 %2908
        %v2910 = vadd.f32 %v2817, %v2818
        %2911 = vadd.xlane.f32.xlu0 %v2910
        %v2912 = vpop.xlane.xlu0 %2911
        %v2913 = vadd.f32 %v2819, %v2820
        %2914 = vadd.xlane.f32.xlu0 %v2913
        %v2915 = vpop.xlane.xlu0 %2914
        %v2916 = vadd.f32 %v2821, %v2822
        %2917 = vadd.xlane.f32.xlu0 %v2916
        %v2918 = vpop.xlane.xlu0 %2917
        %s2919 = sld [smem:[#allocation2]]
        %v2920 = vstv %s2919
        %v2921 = vadd.f32 %v2825, %v2920
        %v2922 = vadd.f32 %v2828, %v2920
        %v2923 = vadd.f32 %v2831, %v2920
        %v2924 = vadd.f32 %v2834, %v2920
        %v2925 = vadd.f32 %v2837, %v2920
        %v2926 = vadd.f32 %v2840, %v2920
        %v2927 = vadd.f32 %v2843, %v2920
        %v2928 = vadd.f32 %v2846, %v2920
        %v2929 = vadd.f32 %v2849, %v2920
        %v2930 = vadd.f32 %v2852, %v2920
        %v2931 = vadd.f32 %v2855, %v2920
        %v2932 = vadd.f32 %v2858, %v2920
        %v2933 = vadd.f32 %v2861, %v2920
        %v2934 = vadd.f32 %v2864, %v2920
        %v2935 = vadd.f32 %v2867, %v2920
        %v2936 = vadd.f32 %v2870, %v2920
        %v2937 = vadd.f32 %v2873, %v2920
        %v2938 = vadd.f32 %v2876, %v2920
        %v2939 = vadd.f32 %v2879, %v2920
        %v2940 = vadd.f32 %v2882, %v2920
        %v2941 = vadd.f32 %v2885, %v2920
        %v2942 = vadd.f32 %v2888, %v2920
        %v2943 = vadd.f32 %v2891, %v2920
        %v2944 = vadd.f32 %v2894, %v2920
        %v2945 = vadd.f32 %v2897, %v2920
        %v2946 = vadd.f32 %v2900, %v2920
        %v2947 = vadd.f32 %v2903, %v2920
        %v2948 = vadd.f32 %v2906, %v2920
        %v2949 = vadd.f32 %v2909, %v2920
        %v2950 = vadd.f32 %v2912, %v2920
        %v2951 = vadd.f32 %v2915, %v2920
        %v2952 = vadd.f32 %v2918, %v2920
        %vm2953 = vcmask 7168
        %2954 = vst.msk [vmem:[%s330] sm:$0xff] %vm2953, %v2921
        %2955 = vst.msk [vmem:[%s330 + $0x8] sm:$0xff] %vm2953, %v2922
        %2956 = vst.msk [vmem:[%s330 + $0x10] sm:$0xff] %vm2953, %v2923
        %2957 = vst.msk [vmem:[%s330 + $0x18] sm:$0xff] %vm2953, %v2924
        %2958 = vst.msk [vmem:[%s330 + $0x20] sm:$0xff] %vm2953, %v2925
        %2959 = vst.msk [vmem:[%s330 + $0x28] sm:$0xff] %vm2953, %v2926
        %2960 = vst.msk [vmem:[%s330 + $0x30] sm:$0xff] %vm2953, %v2927
        %2961 = vst.msk [vmem:[%s330 + $0x38] sm:$0xff] %vm2953, %v2928
        %2962 = vst.msk [vmem:[%s330 + $0x40] sm:$0xff] %vm2953, %v2929
        %2963 = vst.msk [vmem:[%s330 + $0x48] sm:$0xff] %vm2953, %v2930
        %2964 = vst.msk [vmem:[%s330 + $0x50] sm:$0xff] %vm2953, %v2931
        %2965 = vst.msk [vmem:[%s330 + $0x58] sm:$0xff] %vm2953, %v2932
        %2966 = vst.msk [vmem:[%s330 + $0x60] sm:$0xff] %vm2953, %v2933
        %2967 = vst.msk [vmem:[%s330 + $0x68] sm:$0xff] %vm2953, %v2934
        %2968 = vst.msk [vmem:[%s330 + $0x70] sm:$0xff] %vm2953, %v2935
        %2969 = vst.msk [vmem:[%s330 + $0x78] sm:$0xff] %vm2953, %v2936
        %2970 = vst.msk [vmem:[%s330 + $0x80] sm:$0xff] %vm2953, %v2937
        %2971 = vst.msk [vmem:[%s330 + $0x88] sm:$0xff] %vm2953, %v2938
        %2972 = vst.msk [vmem:[%s330 + $0x90] sm:$0xff] %vm2953, %v2939
        %2973 = vst.msk [vmem:[%s330 + $0x98] sm:$0xff] %vm2953, %v2940
        %2974 = vst.msk [vmem:[%s330 + $0xa0] sm:$0xff] %vm2953, %v2941
        %2975 = vst.msk [vmem:[%s330 + $0xa8] sm:$0xff] %vm2953, %v2942
        %2976 = vst.msk [vmem:[%s330 + $0xb0] sm:$0xff] %vm2953, %v2943
        %2977 = vst.msk [vmem:[%s330 + $0xb8] sm:$0xff] %vm2953, %v2944
        %2978 = vst.msk [vmem:[%s330 + $0xc0] sm:$0xff] %vm2953, %v2945
        %2979 = vst.msk [vmem:[%s330 + $0xc8] sm:$0xff] %vm2953, %v2946
        %2980 = vst.msk [vmem:[%s330 + $0xd0] sm:$0xff] %vm2953, %v2947
        %2981 = vst.msk [vmem:[%s330 + $0xd8] sm:$0xff] %vm2953, %v2948
        %2982 = vst.msk [vmem:[%s330 + $0xe0] sm:$0xff] %vm2953, %v2949
        %2983 = vst.msk [vmem:[%s330 + $0xe8] sm:$0xff] %vm2953, %v2950
        %2984 = vst.msk [vmem:[%s330 + $0xf0] sm:$0xff] %vm2953, %v2951
        %2985 = vst.msk [vmem:[%s330 + $0xf8] sm:$0xff] %vm2953, %v2952
        %s2986 = smul.u32 32, %s23
        %p2987 = scmp.lt.s32.totalorder %s2986, 63
        %s2988 = scalar_select %p2987, %s2986, 63
        %s2989 = smul.addr %s2988, 8
        %s2990 = scalar_lea.vmem %s7, %s2989
        // Predicated region
        $region61: #{tpu_custom_call.1} parent=47 // pred_check
          %p2991 = pneg %p193
        $region62: #{tpu_custom_call.1} parent=47 // pred_check_branch
          %2993 = sbr.rel (%p2991) target = $region64
        $region63: #{tpu_custom_call.1} parent=47 // pred_region
          %s2994 = smul.u32 32, %s23
        $region64: #{tpu_custom_call.1} parent=47 // pred_fallthru
          _
      $region48: #{tpu_custom_call.1} parent=5 // pred_fallthru
        _
      %p2995 = scmp.le.s32.totalorder 2, %s18
      // Predicated region
      $region65: #{tpu_custom_call.1} parent=5 // pred_check
        %p2996 = pneg %p2995
      $region66: #{tpu_custom_call.1} parent=5 // pred_check_branch
        %2998 = sbr.rel (%p2996) target = $region68
      $region67: #{tpu_custom_call.1} parent=5 // pred_region
        %s2999 = ssub.s32 %s18, 2
        // Predicated region
        $region69: #{tpu_custom_call.1} parent=67 // pred_check
          %p3000 = pneg %p199
        $region70: #{tpu_custom_call.1} parent=67 // pred_check_branch
          %3002 = sbr.rel (%p3000) target = $region72
        $region71: #{tpu_custom_call.1} parent=67 // pred_region
          %s3003 = smul.u32 32, %s24
          %p3004 = scmp.lt.s32.totalorder %s3003, 63
          %s3005 = scalar_select %p3004, %s3003, 63
          %s3006 = smul.addr %s3005, 8
          %s3007 = scalar_lea.vmem %s7, %s3006
        $region72: #{tpu_custom_call.1} parent=67 // pred_fallthru
          _
      $region68: #{tpu_custom_call.1} parent=5 // pred_fallthru
        _
    $region6: #{tpu_custom_call.1} parent=1 // loop_footer
      %s22 = sadd.s32 1, %s18
    $region7: #{tpu_custom_call.1} parent=1 // loop_footer_branch
      %17 = sbr.rel target = $region3
    $region8: #{tpu_custom_call.1} parent=1 // loop_exit
      _
    %3008 = vsyncpa [#allocation4], 1
    %s3009 = scalar_lea.sflag [#allocation4], 1
    %3010 = vsyncpa %s3009, 1
    %3011 = vsyncpa [#allocation6], 1

</llo_original>
